<compile_context>
chip_gen: v7x
topology: tpu7x:2x2x1
jax: 0.10.0
libtpu: 0.0.40
codegen_flags: <defaults>
</compile_context>

<pallas_src>
import functools

import jax
import jax.numpy as jnp
from jax.experimental import pallas as pl
from jax.experimental.pallas import tpu as pltpu

LANE = 128
SUBLANE = 8
UNROLL = 8          # timesteps per grid iteration


def _round_up(x, m):
    return -(-x // m) * m


def rnn_seq_kernel(n_layers, seq_len, seq_pad, unroll, packed,
                   # --- refs ---
                   tok_ref,      # SMEM (seq_pad,) int32   token ids (scalar prefetch)
                   emb_ref,      # VMEM (V_pad, H_pad) f32 embedding table (resident)
                   w_cat_ref,    # VMEM (L, C, H_pad)  bf16 fused [W_ih;W_hh] per layer
                   b_cat_ref,    # VMEM (L, 1, H_pad)  f32  b_ih + b_hh per layer
                   w_dec_ref,    # VMEM (H_pad, O_pad) bf16
                   b_dec_ref,    # VMEM (1, O_pad)     f32
                   h0_ref,       # VMEM (L, 1, H_pad)  f32  initial hidden (slot layout)
                   out_ref,      # VMEM (seq_pad, O_pad) f32 resident output (logits)
                   hfin_ref,     # VMEM (L, 1, H_pad)  f32  resident output (final hidden)
                   h_scr,        # VMEM (L, 1, H_pad)  f32  scratch: running hidden
                   hseq_scr):    # VMEM (seq_pad, H_pad) f32 scratch: top-layer hidden/step
    blk = pl.program_id(0)
    nblk = pl.num_programs(0)
    mm_dtype = w_cat_ref.dtype

    @pl.when(blk == 0)
    def _init():
        h_scr[...] = h0_ref[...]
        hseq_scr[...] = jnp.zeros_like(hseq_scr)

    def one_step(step):
        tok = tok_ref[step]
        x = emb_ref[pl.ds(tok, 1), :]                     # (1, H_pad) f32, lanes [0,H)
        for layer in range(n_layers):
            h = h_scr[layer]                              # (1, H_pad) f32
            if packed:
                # x and this layer's hidden occupy disjoint lane slots, so a
                # single add forms the packed [x | h] row (no concat, no roll).
                xh = x + h                                # (1, H_pad)
            else:
                xh = jnp.concatenate([x, h], axis=-1)     # (1, 2*H_pad)
            pre = jnp.dot(xh.astype(mm_dtype), w_cat_ref[layer],
                          preferred_element_type=jnp.float32)
            pre = pre + b_cat_ref[layer]                  # f32
            x = jnp.tanh(pre)                             # f32; zeros stay zeros
            h_scr[layer] = x                              # new hidden, already in its slot
        hseq_scr[pl.ds(step, 1), :] = x                   # top-layer hidden for this step

    base = blk * unroll
    for u in range(unroll):
        step = base + u
        # Only unroll positions that can fall past seq_len (tail of the last
        # block) need a dynamic guard; all others run unconditionally.
        if seq_pad - unroll + u >= seq_len:
            @pl.when(step < seq_len)
            def _(step=step):
                one_step(step)
        else:
            one_step(step)

    # Decoder hoisted out of the recurrence: one M=seq_pad matmul at the end.
    @pl.when(blk == nblk - 1)
    def _finalize():
        hs = hseq_scr[...].astype(mm_dtype)               # (seq_pad, H_pad)
        out_ref[...] = (jnp.dot(hs, w_dec_ref[...],
                                preferred_element_type=jnp.float32)
                        + b_dec_ref[...])
        hfin_ref[...] = h_scr[...]


def prepare_params(params, weight_dtype=jnp.bfloat16):
    """Pad / fuse / lane-pack PyTorch-layout params once, outside the kernel."""
    V, H = params["emb"].shape
    O = params["w_dec"].shape[1]
    L = params["w_ih"].shape[0]
    H_pad = _round_up(H, LANE)
    O_pad = _round_up(O, LANE)
    V_pad = _round_up(V, SUBLANE)
    packed = 2 * H <= LANE                 # pack x and h into one 128-lane row
    C = H_pad if packed else 2 * H_pad
    f32 = jnp.float32

    # Per-layer lane slots (packed mode): layer l reads its feed-forward input
    # from slot l%2 and keeps/produces its hidden in slot (l+1)%2, so the two
    # never collide and h needs no per-step shift.
    if packed:
        in_slot = [l % 2 for l in range(L)]
        out_slot = [(l + 1) % 2 for l in range(L)]
    else:
        in_slot = [0] * L
        out_slot = [0] * L

    emb_p = jnp.zeros((V_pad, H_pad), f32).at[:V, :H].set(params["emb"])

    w_cat = jnp.zeros((L, C, H_pad), f32)
    b_cat = jnp.zeros((L, 1, H_pad), f32)
    for l in range(L):
        ri = in_slot[l] * H                               # rows fed by x
        co = out_slot[l] * H                              # cols where output lands
        rh = out_slot[l] * H if packed else H_pad         # rows fed by h
        w_cat = w_cat.at[l, ri:ri + H, co:co + H].set(params["w_ih"][l])
        w_cat = w_cat.at[l, rh:rh + H, co:co + H].set(params["w_hh"][l])
        # Pre-add the two RNN biases here (kept separate in the state dict).
        b_cat = b_cat.at[l, :, co:co + H].set(params["b_ih"][l] + params["b_hh"][l])

    dec_row = out_slot[L - 1] * H
    w_dec = jnp.zeros((H_pad, O_pad), f32)
    w_dec = w_dec.at[dec_row:dec_row + H, :O].set(params["w_dec"])
    b_dec = jnp.zeros((1, O_pad), f32).at[:, :O].set(params["b_dec"])

    return dict(
        emb=emb_p,                                        # f32: keeps the dynamic row
        w_cat=w_cat.astype(weight_dtype),                 # gather simple; tiny here
        b_cat=b_cat,
        w_dec=w_dec.astype(weight_dtype),
        b_dec=b_dec,
        hidden_size=H, out_size=O, n_layers=L,
        H_pad=H_pad, O_pad=O_pad,
        packed=packed, out_slot=tuple(out_slot),
    )


def rnn_forward_seq(pp, tokens, hidden, unroll=UNROLL):
    """Run T fused RNN steps.  tokens: (T,) int, hidden: (L,1,H) f32.
    Returns (outputs (T, O), final hidden (L, 1, H))."""
    L, H, O = pp["n_layers"], pp["hidden_size"], pp["out_size"]
    H_pad, O_pad = pp["H_pad"], pp["O_pad"]
    T = int(tokens.shape[0])
    nblk = max(1, -(-T // unroll))
    T_pad = nblk * unroll

    tok_p = jnp.zeros((T_pad,), jnp.int32).at[:T].set(tokens.astype(jnp.int32))

    # Lay the logical hidden state into each layer's lane slot; padded lanes
    # stay exactly 0 through the recurrence (zero weights/biases, tanh(0)=0).
    h0 = jnp.zeros((L, 1, H_pad), jnp.float32)
    for l in range(L):
        s = pp["out_slot"][l] * H
        h0 = h0.at[l, :, s:s + H].set(hidden[l])

    kernel = functools.partial(rnn_seq_kernel, L, T, T_pad, unroll, pp["packed"])

    grid_spec = pltpu.PrefetchScalarGridSpec(
        num_scalar_prefetch=1,               # token ids -> SMEM
        grid=(nblk,),                        # `unroll` timesteps per grid step
        in_specs=[
            # Constant block indices -> DMA'd once, VMEM-resident all sequence.
            pl.BlockSpec(pp["emb"].shape,   lambda b, tok: (0, 0)),
            pl.BlockSpec(pp["w_cat"].shape, lambda b, tok: (0, 0, 0)),
            pl.BlockSpec(pp["b_cat"].shape, lambda b, tok: (0, 0, 0)),
            pl.BlockSpec(pp["w_dec"].shape, lambda b, tok: (0, 0)),
            pl.BlockSpec(pp["b_dec"].shape, lambda b, tok: (0, 0)),
            pl.BlockSpec((L, 1, H_pad),     lambda b, tok: (0, 0, 0)),
        ],
        out_specs=[
            # Resident across the whole grid -> single bulk write-back.
            pl.BlockSpec((T_pad, O_pad),  lambda b, tok: (0, 0)),
            pl.BlockSpec((L, 1, H_pad),   lambda b, tok: (0, 0, 0)),
        ],
        scratch_shapes=[
            pltpu.VMEM((L, 1, H_pad), jnp.float32),      # running hidden
            pltpu.VMEM((T_pad, H_pad), jnp.float32),     # top-layer hidden per step
        ],
    )

    outs_p, h_p = pl.pallas_call(
        kernel,
        grid_spec=grid_spec,
        out_shape=(jax.ShapeDtypeStruct((T_pad, O_pad), jnp.float32),
                   jax.ShapeDtypeStruct((L, 1, H_pad), jnp.float32)),
        compiler_params=pltpu.CompilerParams(
            dimension_semantics=("arbitrary",)),         # true recurrence: sequential
    )(tok_p, pp["emb"], pp["w_cat"], pp["b_cat"], pp["w_dec"], pp["b_dec"], h0)

    # Un-pack the per-layer lane slots back to the logical hidden layout.
    h_fin = jnp.stack(
        [h_p[l, :, pp["out_slot"][l] * H: pp["out_slot"][l] * H + H]
         for l in range(L)], axis=0)
    return outs_p[:T, :O], h_fin


def rnn_forward(pp, token, hidden):
    """Single step with the original module's forward signature:
    token (1,) int32, hidden (L,1,H) -> (output (1,O), hidden (L,1,H))."""
    return rnn_forward_seq(pp, jnp.reshape(token, (1,)), hidden)


def rnn_seq_ref(params, tokens, hidden, mm_dtype=jnp.float32):
    """Pure-JAX step-by-step reference with PyTorch forward semantics.
    mm_dtype lets the reference emulate the kernel's bf16 matmul inputs."""
    def mm(a, b):
        return jnp.dot(a.astype(mm_dtype), b.astype(mm_dtype),
                       preferred_element_type=jnp.float32)
    outs = []
    h = hidden
    for idx in range(tokens.shape[0]):
        x = params["emb"][tokens[idx]][None, :]            # (1, H)
        new_h = []
        for l in range(h.shape[0]):
            hl = jnp.tanh(mm(x, params["w_ih"][l]) + params["b_ih"][l]
                          + mm(h[l], params["w_hh"][l]) + params["b_hh"][l])
            new_h.append(hl)
            x = hl
        h = jnp.stack(new_h, axis=0)
        outs.append(mm(x, params["w_dec"]) + params["b_dec"])
    return jnp.concatenate(outs, axis=0), h


def init_params(key, input_size, hidden_size, output_size, n_layers):
    ks = jax.random.split(key, 7)
    s = 1.0 / jnp.sqrt(hidden_size).astype(jnp.float32)
    f32 = jnp.float32
    return dict(
        # nn.Embedding default init ~ N(0, 1)
        emb=jax.random.normal(ks[0], (input_size, hidden_size), f32),
        # nn.RNN / nn.Linear default init ~ U(-1/sqrt(H), 1/sqrt(H)); stored
        # (in, out) so the kernel computes x @ W (PyTorch does x @ W^T).
        w_ih=jax.random.uniform(ks[1], (n_layers, hidden_size, hidden_size), f32, -s, s),
        w_hh=jax.random.uniform(ks[2], (n_layers, hidden_size, hidden_size), f32, -s, s),
        b_ih=jax.random.uniform(ks[3], (n_layers, 1, hidden_size), f32, -s, s),
        b_hh=jax.random.uniform(ks[4], (n_layers, 1, hidden_size), f32, -s, s),
        w_dec=jax.random.uniform(ks[5], (hidden_size, output_size), f32, -s, s),
        b_dec=jax.random.uniform(ks[6], (1, output_size), f32, -s, s),
    )


if __name__ == "__main__":
    V, H, O, L, T = 64, 32, 64, 2, 16   # vocab, hidden, output(vocab), layers, seq len

    key = jax.random.PRNGKey(0)
    pkey, hkey, tkey = jax.random.split(key, 3)
    params = init_params(pkey, V, H, O, L)

    tokens = jax.random.randint(tkey, (T,), 0, V, dtype=jnp.int32)
    hidden = jax.random.normal(hkey, (L, 1, H), jnp.float32)

    # --- 1) f32-weight kernel vs pure f32 reference (tight, validates logic) ---
    pp_f32 = prepare_params(params, weight_dtype=jnp.float32)
    outs32, hfin32 = rnn_forward_seq(pp_f32, tokens, hidden)
    jax.block_until_ready((outs32, hfin32))
    ref_o32, ref_h32 = rnn_seq_ref(params, tokens, hidden, mm_dtype=jnp.float32)
    assert outs32.shape == (T, O) and hfin32.shape == (L, 1, H)
    assert jnp.allclose(outs32, ref_o32, atol=5e-3, rtol=5e-3)
    assert jnp.allclose(hfin32, ref_h32, atol=5e-3, rtol=5e-3)

    # --- 2) bf16-weight kernel (production config) vs bf16-emulating reference ---
    pp = prepare_params(params, weight_dtype=jnp.bfloat16)
    outs, h_final = rnn_forward_seq(pp, tokens, hidden)
    jax.block_until_ready((outs, h_final))
    ref_o, ref_h = rnn_seq_ref(params, tokens, hidden, mm_dtype=jnp.bfloat16)
    assert outs.shape == (T, O) and h_final.shape == (L, 1, H)
    assert jnp.allclose(outs, ref_o, atol=5e-3, rtol=5e-3)
    assert jnp.allclose(h_final, ref_h, atol=5e-3, rtol=5e-3)

    # --- 3) single-step form (original module forward signature), same kernel ---
    out1, h1 = rnn_forward(pp, tokens[:1], hidden)
    jax.block_until_ready((out1, h1))
    ref_o1, ref_h1 = rnn_seq_ref(params, tokens[:1], hidden, mm_dtype=jnp.bfloat16)
    assert out1.shape == (1, O) and h1.shape == (L, 1, H)
    assert jnp.allclose(out1, ref_o1, atol=5e-3, rtol=5e-3)
    assert jnp.allclose(h1, ref_h1, atol=5e-3, rtol=5e-3)

    print("KERNEL_OK")
</pallas_src>

<mosaic_0001>
module attributes {stable_mosaic.version = 11 : i64} {
  func.func @rnn_seq_kernel(%arg0: i32, %arg1: memref<16xi32, #tpu.memory_space<smem>>, %arg2: memref<64x128xf32, #tpu.memory_space<vmem>>, %arg3: memref<2x128x128xf32, #tpu.memory_space<vmem>>, %arg4: memref<2x1x128xf32, #tpu.memory_space<vmem>>, %arg5: memref<128x128xf32, #tpu.memory_space<vmem>>, %arg6: memref<1x128xf32, #tpu.memory_space<vmem>>, %arg7: memref<2x1x128xf32, #tpu.memory_space<vmem>>, %arg8: memref<16x128xf32, #tpu.memory_space<vmem>>, %arg9: memref<2x1x128xf32, #tpu.memory_space<vmem>>, %arg10: memref<2x1x128xf32, #tpu.memory_space<vmem>>, %arg11: memref<16x128xf32, #tpu.memory_space<vmem>>) attributes {dimension_semantics = [#tpu.dimension_semantics<arbitrary>], iteration_bounds = array<i64: 2>, scalar_prefetch = 1 : i64, scratch_operands = 2 : i64, tpu.core_type = #tpu.core_type<tc>, window_params = [{pipeline_mode = #tpu.pipeline_mode<synchronous>, transform_indices = @transform_0, window_bounds = array<i64: 64, 128>}, {pipeline_mode = #tpu.pipeline_mode<synchronous>, transform_indices = @transform_1, window_bounds = array<i64: 2, 128, 128>}, {pipeline_mode = #tpu.pipeline_mode<synchronous>, transform_indices = @transform_2, window_bounds = array<i64: 2, 1, 128>}, {pipeline_mode = #tpu.pipeline_mode<synchronous>, transform_indices = @transform_3, window_bounds = array<i64: 128, 128>}, {pipeline_mode = #tpu.pipeline_mode<synchronous>, transform_indices = @transform_4, window_bounds = array<i64: 1, 128>}, {pipeline_mode = #tpu.pipeline_mode<synchronous>, transform_indices = @transform_5, window_bounds = array<i64: 2, 1, 128>}, {pipeline_mode = #tpu.pipeline_mode<synchronous>, transform_indices = @transform_6, window_bounds = array<i64: 16, 128>}, {pipeline_mode = #tpu.pipeline_mode<synchronous>, transform_indices = @transform_7, window_bounds = array<i64: 2, 1, 128>}]} {
    %c0_i32 = arith.constant 0 : i32
    %0 = arith.cmpi eq, %arg0, %c0_i32 : i32
    %1 = arith.extui %0 : i1 to i32
    %c0_i32_0 = arith.constant 0 : i32
    %2 = arith.cmpi ne, %1, %c0_i32_0 : i32
    scf.if %2 {
      %c0_225 = arith.constant 0 : index
      %c0_226 = arith.constant 0 : index
      %c0_227 = arith.constant 0 : index
      %271 = vector.load %arg7[%c0_225, %c0_226, %c0_227] : memref<2x1x128xf32, #tpu.memory_space<vmem>>, vector<2x1x128xf32>
      %c0_228 = arith.constant 0 : index
      %c0_229 = arith.constant 0 : index
      %c0_230 = arith.constant 0 : index
      %272 = vector.load %arg10[%c0_228, %c0_229, %c0_230] : memref<2x1x128xf32, #tpu.memory_space<vmem>>, vector<2x1x128xf32>
      tpu.vector_store %arg10[%c0_228, %c0_229, %c0_230], %271 {strides = array<i32>} : memref<2x1x128xf32, #tpu.memory_space<vmem>>, vector<2x1x128xf32>,
      %cst_231 = arith.constant 0.000000e+00 : f32
      %273 = vector.broadcast %cst_231 : f32 to vector<16x128xf32>
      %c0_232 = arith.constant 0 : index
      %c0_233 = arith.constant 0 : index
      %274 = vector.load %arg11[%c0_232, %c0_233] : memref<16x128xf32, #tpu.memory_space<vmem>>, vector<16x128xf32>
      tpu.vector_store %arg11[%c0_232, %c0_233], %273 {strides = array<i32>} : memref<16x128xf32, #tpu.memory_space<vmem>>, vector<16x128xf32>,
    } else {
    }
    %c8_i32 = arith.constant 8 : i32
    %3 = arith.muli %arg0, %c8_i32 : i32
    %c0_i32_1 = arith.constant 0 : i32
    %4 = arith.addi %3, %c0_i32_1 : i32
    %5 = arith.index_cast %4 : i32 to index
    %6 = memref.load %arg1[%5] : memref<16xi32, #tpu.memory_space<smem>>
    %7 = arith.index_cast %6 : i32 to index
    %c0 = arith.constant 0 : index
    %8 = vector.load %arg2[%7, %c0] : memref<64x128xf32, #tpu.memory_space<vmem>>, vector<1x128xf32>
    %c0_2 = arith.constant 0 : index
    %c0_3 = arith.constant 0 : index
    %c0_4 = arith.constant 0 : index
    %9 = vector.load %arg10[%c0_2, %c0_3, %c0_4] : memref<2x1x128xf32, #tpu.memory_space<vmem>>, vector<1x1x128xf32>
    %10 = vector.shape_cast %9 : vector<1x1x128xf32> to vector<1x128xf32>
    %11 = arith.addf %8, %10 : vector<1x128xf32>
    %c0_5 = arith.constant 0 : index
    %c0_6 = arith.constant 0 : index
    %c0_7 = arith.constant 0 : index
    %12 = vector.load %arg3[%c0_5, %c0_6, %c0_7] : memref<2x128x128xf32, #tpu.memory_space<vmem>>, vector<1x128x128xf32>
    %13 = vector.shape_cast %12 : vector<1x128x128xf32> to vector<128x128xf32>
    %cst = arith.constant dense<0.000000e+00> : vector<1x128xf32>
    %14 = tpu.matmul %11, %13, %cst {dimension_numbers = #tpu.dot_dimension_numbers<[1], [0], [0], [1], [0, 0, 1, 1], [], []>} : vector<1x128xf32>, vector<128x128xf32>, vector<1x128xf32> -> vector<1x128xf32>
    %c0_8 = arith.constant 0 : index
    %c0_9 = arith.constant 0 : index
    %c0_10 = arith.constant 0 : index
    %15 = vector.load %arg4[%c0_8, %c0_9, %c0_10] : memref<2x1x128xf32, #tpu.memory_space<vmem>>, vector<1x1x128xf32>
    %16 = vector.shape_cast %15 : vector<1x1x128xf32> to vector<1x128xf32>
    %17 = arith.addf %14, %16 : vector<1x128xf32>
    %18 = math.tanh %17 : vector<1x128xf32>
    %c0_11 = arith.constant 0 : index
    %c0_12 = arith.constant 0 : index
    %c0_13 = arith.constant 0 : index
    %19 = vector.load %arg10[%c0_11, %c0_12, %c0_13] : memref<2x1x128xf32, #tpu.memory_space<vmem>>, vector<1x1x128xf32>
    %20 = vector.shape_cast %19 : vector<1x1x128xf32> to vector<1x128xf32>
    %21 = vector.shape_cast %18 : vector<1x128xf32> to vector<1x1x128xf32>
    tpu.vector_store %arg10[%c0_11, %c0_12, %c0_13], %21 {strides = array<i32>} : memref<2x1x128xf32, #tpu.memory_space<vmem>>, vector<1x1x128xf32>,
    %c1 = arith.constant 1 : index
    %c0_14 = arith.constant 0 : index
    %c0_15 = arith.constant 0 : index
    %22 = vector.load %arg10[%c1, %c0_14, %c0_15] : memref<2x1x128xf32, #tpu.memory_space<vmem>>, vector<1x1x128xf32>
    %23 = vector.shape_cast %22 : vector<1x1x128xf32> to vector<1x128xf32>
    %24 = arith.addf %18, %23 : vector<1x128xf32>
    %c1_16 = arith.constant 1 : index
    %c0_17 = arith.constant 0 : index
    %c0_18 = arith.constant 0 : index
    %25 = vector.load %arg3[%c1_16, %c0_17, %c0_18] : memref<2x128x128xf32, #tpu.memory_space<vmem>>, vector<1x128x128xf32>
    %26 = vector.shape_cast %25 : vector<1x128x128xf32> to vector<128x128xf32>
    %cst_19 = arith.constant dense<0.000000e+00> : vector<1x128xf32>
    %27 = tpu.matmul %24, %26, %cst_19 {dimension_numbers = #tpu.dot_dimension_numbers<[1], [0], [0], [1], [0, 0, 1, 1], [], []>} : vector<1x128xf32>, vector<128x128xf32>, vector<1x128xf32> -> vector<1x128xf32>
    %c1_20 = arith.constant 1 : index
    %c0_21 = arith.constant 0 : index
    %c0_22 = arith.constant 0 : index
    %28 = vector.load %arg4[%c1_20, %c0_21, %c0_22] : memref<2x1x128xf32, #tpu.memory_space<vmem>>, vector<1x1x128xf32>
    %29 = vector.shape_cast %28 : vector<1x1x128xf32> to vector<1x128xf32>
    %30 = arith.addf %27, %29 : vector<1x128xf32>
    %31 = math.tanh %30 : vector<1x128xf32>
    %c1_23 = arith.constant 1 : index
    %c0_24 = arith.constant 0 : index
    %c0_25 = arith.constant 0 : index
    %32 = vector.load %arg10[%c1_23, %c0_24, %c0_25] : memref<2x1x128xf32, #tpu.memory_space<vmem>>, vector<1x1x128xf32>
    %33 = vector.shape_cast %32 : vector<1x1x128xf32> to vector<1x128xf32>
    %34 = vector.shape_cast %31 : vector<1x128xf32> to vector<1x1x128xf32>
    tpu.vector_store %arg10[%c1_23, %c0_24, %c0_25], %34 {strides = array<i32>} : memref<2x1x128xf32, #tpu.memory_space<vmem>>, vector<1x1x128xf32>,
    %35 = arith.index_cast %4 : i32 to index
    %c0_26 = arith.constant 0 : index
    %36 = vector.load %arg11[%35, %c0_26] : memref<16x128xf32, #tpu.memory_space<vmem>>, vector<1x128xf32>
    tpu.vector_store %arg11[%35, %c0_26], %31 {strides = array<i32>} : memref<16x128xf32, #tpu.memory_space<vmem>>, vector<1x128xf32>,
    %c1_i32 = arith.constant 1 : i32
    %37 = arith.addi %3, %c1_i32 : i32
    %38 = arith.index_cast %37 : i32 to index
    %39 = memref.load %arg1[%38] : memref<16xi32, #tpu.memory_space<smem>>
    %40 = arith.index_cast %39 : i32 to index
    %c0_27 = arith.constant 0 : index
    %41 = vector.load %arg2[%40, %c0_27] : memref<64x128xf32, #tpu.memory_space<vmem>>, vector<1x128xf32>
    %c0_28 = arith.constant 0 : index
    %c0_29 = arith.constant 0 : index
    %c0_30 = arith.constant 0 : index
    %42 = vector.load %arg10[%c0_28, %c0_29, %c0_30] : memref<2x1x128xf32, #tpu.memory_space<vmem>>, vector<1x1x128xf32>
    %43 = vector.shape_cast %42 : vector<1x1x128xf32> to vector<1x128xf32>
    %44 = arith.addf %41, %43 : vector<1x128xf32>
    %c0_31 = arith.constant 0 : index
    %c0_32 = arith.constant 0 : index
    %c0_33 = arith.constant 0 : index
    %45 = vector.load %arg3[%c0_31, %c0_32, %c0_33] : memref<2x128x128xf32, #tpu.memory_space<vmem>>, vector<1x128x128xf32>
    %46 = vector.shape_cast %45 : vector<1x128x128xf32> to vector<128x128xf32>
    %cst_34 = arith.constant dense<0.000000e+00> : vector<1x128xf32>
    %47 = tpu.matmul %44, %46, %cst_34 {dimension_numbers = #tpu.dot_dimension_numbers<[1], [0], [0], [1], [0, 0, 1, 1], [], []>} : vector<1x128xf32>, vector<128x128xf32>, vector<1x128xf32> -> vector<1x128xf32>
    %c0_35 = arith.constant 0 : index
    %c0_36 = arith.constant 0 : index
    %c0_37 = arith.constant 0 : index
    %48 = vector.load %arg4[%c0_35, %c0_36, %c0_37] : memref<2x1x128xf32, #tpu.memory_space<vmem>>, vector<1x1x128xf32>
    %49 = vector.shape_cast %48 : vector<1x1x128xf32> to vector<1x128xf32>
    %50 = arith.addf %47, %49 : vector<1x128xf32>
    %51 = math.tanh %50 : vector<1x128xf32>
    %c0_38 = arith.constant 0 : index
    %c0_39 = arith.constant 0 : index
    %c0_40 = arith.constant 0 : index
    %52 = vector.load %arg10[%c0_38, %c0_39, %c0_40] : memref<2x1x128xf32, #tpu.memory_space<vmem>>, vector<1x1x128xf32>
    %53 = vector.shape_cast %52 : vector<1x1x128xf32> to vector<1x128xf32>
    %54 = vector.shape_cast %51 : vector<1x128xf32> to vector<1x1x128xf32>
    tpu.vector_store %arg10[%c0_38, %c0_39, %c0_40], %54 {strides = array<i32>} : memref<2x1x128xf32, #tpu.memory_space<vmem>>, vector<1x1x128xf32>,
    %c1_41 = arith.constant 1 : index
    %c0_42 = arith.constant 0 : index
    %c0_43 = arith.constant 0 : index
    %55 = vector.load %arg10[%c1_41, %c0_42, %c0_43] : memref<2x1x128xf32, #tpu.memory_space<vmem>>, vector<1x1x128xf32>
    %56 = vector.shape_cast %55 : vector<1x1x128xf32> to vector<1x128xf32>
    %57 = arith.addf %51, %56 : vector<1x128xf32>
    %c1_44 = arith.constant 1 : index
    %c0_45 = arith.constant 0 : index
    %c0_46 = arith.constant 0 : index
    %58 = vector.load %arg3[%c1_44, %c0_45, %c0_46] : memref<2x128x128xf32, #tpu.memory_space<vmem>>, vector<1x128x128xf32>
    %59 = vector.shape_cast %58 : vector<1x128x128xf32> to vector<128x128xf32>
    %cst_47 = arith.constant dense<0.000000e+00> : vector<1x128xf32>
    %60 = tpu.matmul %57, %59, %cst_47 {dimension_numbers = #tpu.dot_dimension_numbers<[1], [0], [0], [1], [0, 0, 1, 1], [], []>} : vector<1x128xf32>, vector<128x128xf32>, vector<1x128xf32> -> vector<1x128xf32>
    %c1_48 = arith.constant 1 : index
    %c0_49 = arith.constant 0 : index
    %c0_50 = arith.constant 0 : index
    %61 = vector.load %arg4[%c1_48, %c0_49, %c0_50] : memref<2x1x128xf32, #tpu.memory_space<vmem>>, vector<1x1x128xf32>
    %62 = vector.shape_cast %61 : vector<1x1x128xf32> to vector<1x128xf32>
    %63 = arith.addf %60, %62 : vector<1x128xf32>
    %64 = math.tanh %63 : vector<1x128xf32>
    %c1_51 = arith.constant 1 : index
    %c0_52 = arith.constant 0 : index
    %c0_53 = arith.constant 0 : index
    %65 = vector.load %arg10[%c1_51, %c0_52, %c0_53] : memref<2x1x128xf32, #tpu.memory_space<vmem>>, vector<1x1x128xf32>
    %66 = vector.shape_cast %65 : vector<1x1x128xf32> to vector<1x128xf32>
    %67 = vector.shape_cast %64 : vector<1x128xf32> to vector<1x1x128xf32>
    tpu.vector_store %arg10[%c1_51, %c0_52, %c0_53], %67 {strides = array<i32>} : memref<2x1x128xf32, #tpu.memory_space<vmem>>, vector<1x1x128xf32>,
    %68 = arith.index_cast %37 : i32 to index
    %c0_54 = arith.constant 0 : index
    %69 = vector.load %arg11[%68, %c0_54] : memref<16x128xf32, #tpu.memory_space<vmem>>, vector<1x128xf32>
    tpu.vector_store %arg11[%68, %c0_54], %64 {strides = array<i32>} : memref<16x128xf32, #tpu.memory_space<vmem>>, vector<1x128xf32>,
    %c2_i32 = arith.constant 2 : i32
    %70 = arith.addi %3, %c2_i32 : i32
    %71 = arith.index_cast %70 : i32 to index
    %72 = memref.load %arg1[%71] : memref<16xi32, #tpu.memory_space<smem>>
    %73 = arith.index_cast %72 : i32 to index
    %c0_55 = arith.constant 0 : index
    %74 = vector.load %arg2[%73, %c0_55] : memref<64x128xf32, #tpu.memory_space<vmem>>, vector<1x128xf32>
    %c0_56 = arith.constant 0 : index
    %c0_57 = arith.constant 0 : index
    %c0_58 = arith.constant 0 : index
    %75 = vector.load %arg10[%c0_56, %c0_57, %c0_58] : memref<2x1x128xf32, #tpu.memory_space<vmem>>, vector<1x1x128xf32>
    %76 = vector.shape_cast %75 : vector<1x1x128xf32> to vector<1x128xf32>
    %77 = arith.addf %74, %76 : vector<1x128xf32>
    %c0_59 = arith.constant 0 : index
    %c0_60 = arith.constant 0 : index
    %c0_61 = arith.constant 0 : index
    %78 = vector.load %arg3[%c0_59, %c0_60, %c0_61] : memref<2x128x128xf32, #tpu.memory_space<vmem>>, vector<1x128x128xf32>
    %79 = vector.shape_cast %78 : vector<1x128x128xf32> to vector<128x128xf32>
    %cst_62 = arith.constant dense<0.000000e+00> : vector<1x128xf32>
    %80 = tpu.matmul %77, %79, %cst_62 {dimension_numbers = #tpu.dot_dimension_numbers<[1], [0], [0], [1], [0, 0, 1, 1], [], []>} : vector<1x128xf32>, vector<128x128xf32>, vector<1x128xf32> -> vector<1x128xf32>
    %c0_63 = arith.constant 0 : index
    %c0_64 = arith.constant 0 : index
    %c0_65 = arith.constant 0 : index
    %81 = vector.load %arg4[%c0_63, %c0_64, %c0_65] : memref<2x1x128xf32, #tpu.memory_space<vmem>>, vector<1x1x128xf32>
    %82 = vector.shape_cast %81 : vector<1x1x128xf32> to vector<1x128xf32>
    %83 = arith.addf %80, %82 : vector<1x128xf32>
    %84 = math.tanh %83 : vector<1x128xf32>
    %c0_66 = arith.constant 0 : index
    %c0_67 = arith.constant 0 : index
    %c0_68 = arith.constant 0 : index
    %85 = vector.load %arg10[%c0_66, %c0_67, %c0_68] : memref<2x1x128xf32, #tpu.memory_space<vmem>>, vector<1x1x128xf32>
    %86 = vector.shape_cast %85 : vector<1x1x128xf32> to vector<1x128xf32>
    %87 = vector.shape_cast %84 : vector<1x128xf32> to vector<1x1x128xf32>
    tpu.vector_store %arg10[%c0_66, %c0_67, %c0_68], %87 {strides = array<i32>} : memref<2x1x128xf32, #tpu.memory_space<vmem>>, vector<1x1x128xf32>,
    %c1_69 = arith.constant 1 : index
    %c0_70 = arith.constant 0 : index
    %c0_71 = arith.constant 0 : index
    %88 = vector.load %arg10[%c1_69, %c0_70, %c0_71] : memref<2x1x128xf32, #tpu.memory_space<vmem>>, vector<1x1x128xf32>
    %89 = vector.shape_cast %88 : vector<1x1x128xf32> to vector<1x128xf32>
    %90 = arith.addf %84, %89 : vector<1x128xf32>
    %c1_72 = arith.constant 1 : index
    %c0_73 = arith.constant 0 : index
    %c0_74 = arith.constant 0 : index
    %91 = vector.load %arg3[%c1_72, %c0_73, %c0_74] : memref<2x128x128xf32, #tpu.memory_space<vmem>>, vector<1x128x128xf32>
    %92 = vector.shape_cast %91 : vector<1x128x128xf32> to vector<128x128xf32>
    %cst_75 = arith.constant dense<0.000000e+00> : vector<1x128xf32>
    %93 = tpu.matmul %90, %92, %cst_75 {dimension_numbers = #tpu.dot_dimension_numbers<[1], [0], [0], [1], [0, 0, 1, 1], [], []>} : vector<1x128xf32>, vector<128x128xf32>, vector<1x128xf32> -> vector<1x128xf32>
    %c1_76 = arith.constant 1 : index
    %c0_77 = arith.constant 0 : index
    %c0_78 = arith.constant 0 : index
    %94 = vector.load %arg4[%c1_76, %c0_77, %c0_78] : memref<2x1x128xf32, #tpu.memory_space<vmem>>, vector<1x1x128xf32>
    %95 = vector.shape_cast %94 : vector<1x1x128xf32> to vector<1x128xf32>
    %96 = arith.addf %93, %95 : vector<1x128xf32>
    %97 = math.tanh %96 : vector<1x128xf32>
    %c1_79 = arith.constant 1 : index
    %c0_80 = arith.constant 0 : index
    %c0_81 = arith.constant 0 : index
    %98 = vector.load %arg10[%c1_79, %c0_80, %c0_81] : memref<2x1x128xf32, #tpu.memory_space<vmem>>, vector<1x1x128xf32>
    %99 = vector.shape_cast %98 : vector<1x1x128xf32> to vector<1x128xf32>
    %100 = vector.shape_cast %97 : vector<1x128xf32> to vector<1x1x128xf32>
    tpu.vector_store %arg10[%c1_79, %c0_80, %c0_81], %100 {strides = array<i32>} : memref<2x1x128xf32, #tpu.memory_space<vmem>>, vector<1x1x128xf32>,
    %101 = arith.index_cast %70 : i32 to index
    %c0_82 = arith.constant 0 : index
    %102 = vector.load %arg11[%101, %c0_82] : memref<16x128xf32, #tpu.memory_space<vmem>>, vector<1x128xf32>
    tpu.vector_store %arg11[%101, %c0_82], %97 {strides = array<i32>} : memref<16x128xf32, #tpu.memory_space<vmem>>, vector<1x128xf32>,
    %c3_i32 = arith.constant 3 : i32
    %103 = arith.addi %3, %c3_i32 : i32
    %104 = arith.index_cast %103 : i32 to index
    %105 = memref.load %arg1[%104] : memref<16xi32, #tpu.memory_space<smem>>
    %106 = arith.index_cast %105 : i32 to index
    %c0_83 = arith.constant 0 : index
    %107 = vector.load %arg2[%106, %c0_83] : memref<64x128xf32, #tpu.memory_space<vmem>>, vector<1x128xf32>
    %c0_84 = arith.constant 0 : index
    %c0_85 = arith.constant 0 : index
    %c0_86 = arith.constant 0 : index
    %108 = vector.load %arg10[%c0_84, %c0_85, %c0_86] : memref<2x1x128xf32, #tpu.memory_space<vmem>>, vector<1x1x128xf32>
    %109 = vector.shape_cast %108 : vector<1x1x128xf32> to vector<1x128xf32>
    %110 = arith.addf %107, %109 : vector<1x128xf32>
    %c0_87 = arith.constant 0 : index
    %c0_88 = arith.constant 0 : index
    %c0_89 = arith.constant 0 : index
    %111 = vector.load %arg3[%c0_87, %c0_88, %c0_89] : memref<2x128x128xf32, #tpu.memory_space<vmem>>, vector<1x128x128xf32>
    %112 = vector.shape_cast %111 : vector<1x128x128xf32> to vector<128x128xf32>
    %cst_90 = arith.constant dense<0.000000e+00> : vector<1x128xf32>
    %113 = tpu.matmul %110, %112, %cst_90 {dimension_numbers = #tpu.dot_dimension_numbers<[1], [0], [0], [1], [0, 0, 1, 1], [], []>} : vector<1x128xf32>, vector<128x128xf32>, vector<1x128xf32> -> vector<1x128xf32>
    %c0_91 = arith.constant 0 : index
    %c0_92 = arith.constant 0 : index
    %c0_93 = arith.constant 0 : index
    %114 = vector.load %arg4[%c0_91, %c0_92, %c0_93] : memref<2x1x128xf32, #tpu.memory_space<vmem>>, vector<1x1x128xf32>
    %115 = vector.shape_cast %114 : vector<1x1x128xf32> to vector<1x128xf32>
    %116 = arith.addf %113, %115 : vector<1x128xf32>
    %117 = math.tanh %116 : vector<1x128xf32>
    %c0_94 = arith.constant 0 : index
    %c0_95 = arith.constant 0 : index
    %c0_96 = arith.constant 0 : index
    %118 = vector.load %arg10[%c0_94, %c0_95, %c0_96] : memref<2x1x128xf32, #tpu.memory_space<vmem>>, vector<1x1x128xf32>
    %119 = vector.shape_cast %118 : vector<1x1x128xf32> to vector<1x128xf32>
    %120 = vector.shape_cast %117 : vector<1x128xf32> to vector<1x1x128xf32>
    tpu.vector_store %arg10[%c0_94, %c0_95, %c0_96], %120 {strides = array<i32>} : memref<2x1x128xf32, #tpu.memory_space<vmem>>, vector<1x1x128xf32>,
    %c1_97 = arith.constant 1 : index
    %c0_98 = arith.constant 0 : index
    %c0_99 = arith.constant 0 : index
    %121 = vector.load %arg10[%c1_97, %c0_98, %c0_99] : memref<2x1x128xf32, #tpu.memory_space<vmem>>, vector<1x1x128xf32>
    %122 = vector.shape_cast %121 : vector<1x1x128xf32> to vector<1x128xf32>
    %123 = arith.addf %117, %122 : vector<1x128xf32>
    %c1_100 = arith.constant 1 : index
    %c0_101 = arith.constant 0 : index
    %c0_102 = arith.constant 0 : index
    %124 = vector.load %arg3[%c1_100, %c0_101, %c0_102] : memref<2x128x128xf32, #tpu.memory_space<vmem>>, vector<1x128x128xf32>
    %125 = vector.shape_cast %124 : vector<1x128x128xf32> to vector<128x128xf32>
    %cst_103 = arith.constant dense<0.000000e+00> : vector<1x128xf32>
    %126 = tpu.matmul %123, %125, %cst_103 {dimension_numbers = #tpu.dot_dimension_numbers<[1], [0], [0], [1], [0, 0, 1, 1], [], []>} : vector<1x128xf32>, vector<128x128xf32>, vector<1x128xf32> -> vector<1x128xf32>
    %c1_104 = arith.constant 1 : index
    %c0_105 = arith.constant 0 : index
    %c0_106 = arith.constant 0 : index
    %127 = vector.load %arg4[%c1_104, %c0_105, %c0_106] : memref<2x1x128xf32, #tpu.memory_space<vmem>>, vector<1x1x128xf32>
    %128 = vector.shape_cast %127 : vector<1x1x128xf32> to vector<1x128xf32>
    %129 = arith.addf %126, %128 : vector<1x128xf32>
    %130 = math.tanh %129 : vector<1x128xf32>
    %c1_107 = arith.constant 1 : index
    %c0_108 = arith.constant 0 : index
    %c0_109 = arith.constant 0 : index
    %131 = vector.load %arg10[%c1_107, %c0_108, %c0_109] : memref<2x1x128xf32, #tpu.memory_space<vmem>>, vector<1x1x128xf32>
    %132 = vector.shape_cast %131 : vector<1x1x128xf32> to vector<1x128xf32>
    %133 = vector.shape_cast %130 : vector<1x128xf32> to vector<1x1x128xf32>
    tpu.vector_store %arg10[%c1_107, %c0_108, %c0_109], %133 {strides = array<i32>} : memref<2x1x128xf32, #tpu.memory_space<vmem>>, vector<1x1x128xf32>,
    %134 = arith.index_cast %103 : i32 to index
    %c0_110 = arith.constant 0 : index
    %135 = vector.load %arg11[%134, %c0_110] : memref<16x128xf32, #tpu.memory_space<vmem>>, vector<1x128xf32>
    tpu.vector_store %arg11[%134, %c0_110], %130 {strides = array<i32>} : memref<16x128xf32, #tpu.memory_space<vmem>>, vector<1x128xf32>,
    %c4_i32 = arith.constant 4 : i32
    %136 = arith.addi %3, %c4_i32 : i32
    %137 = arith.index_cast %136 : i32 to index
    %138 = memref.load %arg1[%137] : memref<16xi32, #tpu.memory_space<smem>>
    %139 = arith.index_cast %138 : i32 to index
    %c0_111 = arith.constant 0 : index
    %140 = vector.load %arg2[%139, %c0_111] : memref<64x128xf32, #tpu.memory_space<vmem>>, vector<1x128xf32>
    %c0_112 = arith.constant 0 : index
    %c0_113 = arith.constant 0 : index
    %c0_114 = arith.constant 0 : index
    %141 = vector.load %arg10[%c0_112, %c0_113, %c0_114] : memref<2x1x128xf32, #tpu.memory_space<vmem>>, vector<1x1x128xf32>
    %142 = vector.shape_cast %141 : vector<1x1x128xf32> to vector<1x128xf32>
    %143 = arith.addf %140, %142 : vector<1x128xf32>
    %c0_115 = arith.constant 0 : index
    %c0_116 = arith.constant 0 : index
    %c0_117 = arith.constant 0 : index
    %144 = vector.load %arg3[%c0_115, %c0_116, %c0_117] : memref<2x128x128xf32, #tpu.memory_space<vmem>>, vector<1x128x128xf32>
    %145 = vector.shape_cast %144 : vector<1x128x128xf32> to vector<128x128xf32>
    %cst_118 = arith.constant dense<0.000000e+00> : vector<1x128xf32>
    %146 = tpu.matmul %143, %145, %cst_118 {dimension_numbers = #tpu.dot_dimension_numbers<[1], [0], [0], [1], [0, 0, 1, 1], [], []>} : vector<1x128xf32>, vector<128x128xf32>, vector<1x128xf32> -> vector<1x128xf32>
    %c0_119 = arith.constant 0 : index
    %c0_120 = arith.constant 0 : index
    %c0_121 = arith.constant 0 : index
    %147 = vector.load %arg4[%c0_119, %c0_120, %c0_121] : memref<2x1x128xf32, #tpu.memory_space<vmem>>, vector<1x1x128xf32>
    %148 = vector.shape_cast %147 : vector<1x1x128xf32> to vector<1x128xf32>
    %149 = arith.addf %146, %148 : vector<1x128xf32>
    %150 = math.tanh %149 : vector<1x128xf32>
    %c0_122 = arith.constant 0 : index
    %c0_123 = arith.constant 0 : index
    %c0_124 = arith.constant 0 : index
    %151 = vector.load %arg10[%c0_122, %c0_123, %c0_124] : memref<2x1x128xf32, #tpu.memory_space<vmem>>, vector<1x1x128xf32>
    %152 = vector.shape_cast %151 : vector<1x1x128xf32> to vector<1x128xf32>
    %153 = vector.shape_cast %150 : vector<1x128xf32> to vector<1x1x128xf32>
    tpu.vector_store %arg10[%c0_122, %c0_123, %c0_124], %153 {strides = array<i32>} : memref<2x1x128xf32, #tpu.memory_space<vmem>>, vector<1x1x128xf32>,
    %c1_125 = arith.constant 1 : index
    %c0_126 = arith.constant 0 : index
    %c0_127 = arith.constant 0 : index
    %154 = vector.load %arg10[%c1_125, %c0_126, %c0_127] : memref<2x1x128xf32, #tpu.memory_space<vmem>>, vector<1x1x128xf32>
    %155 = vector.shape_cast %154 : vector<1x1x128xf32> to vector<1x128xf32>
    %156 = arith.addf %150, %155 : vector<1x128xf32>
    %c1_128 = arith.constant 1 : index
    %c0_129 = arith.constant 0 : index
    %c0_130 = arith.constant 0 : index
    %157 = vector.load %arg3[%c1_128, %c0_129, %c0_130] : memref<2x128x128xf32, #tpu.memory_space<vmem>>, vector<1x128x128xf32>
    %158 = vector.shape_cast %157 : vector<1x128x128xf32> to vector<128x128xf32>
    %cst_131 = arith.constant dense<0.000000e+00> : vector<1x128xf32>
    %159 = tpu.matmul %156, %158, %cst_131 {dimension_numbers = #tpu.dot_dimension_numbers<[1], [0], [0], [1], [0, 0, 1, 1], [], []>} : vector<1x128xf32>, vector<128x128xf32>, vector<1x128xf32> -> vector<1x128xf32>
    %c1_132 = arith.constant 1 : index
    %c0_133 = arith.constant 0 : index
    %c0_134 = arith.constant 0 : index
    %160 = vector.load %arg4[%c1_132, %c0_133, %c0_134] : memref<2x1x128xf32, #tpu.memory_space<vmem>>, vector<1x1x128xf32>
    %161 = vector.shape_cast %160 : vector<1x1x128xf32> to vector<1x128xf32>
    %162 = arith.addf %159, %161 : vector<1x128xf32>
    %163 = math.tanh %162 : vector<1x128xf32>
    %c1_135 = arith.constant 1 : index
    %c0_136 = arith.constant 0 : index
    %c0_137 = arith.constant 0 : index
    %164 = vector.load %arg10[%c1_135, %c0_136, %c0_137] : memref<2x1x128xf32, #tpu.memory_space<vmem>>, vector<1x1x128xf32>
    %165 = vector.shape_cast %164 : vector<1x1x128xf32> to vector<1x128xf32>
    %166 = vector.shape_cast %163 : vector<1x128xf32> to vector<1x1x128xf32>
    tpu.vector_store %arg10[%c1_135, %c0_136, %c0_137], %166 {strides = array<i32>} : memref<2x1x128xf32, #tpu.memory_space<vmem>>, vector<1x1x128xf32>,
    %167 = arith.index_cast %136 : i32 to index
    %c0_138 = arith.constant 0 : index
    %168 = vector.load %arg11[%167, %c0_138] : memref<16x128xf32, #tpu.memory_space<vmem>>, vector<1x128xf32>
    tpu.vector_store %arg11[%167, %c0_138], %163 {strides = array<i32>} : memref<16x128xf32, #tpu.memory_space<vmem>>, vector<1x128xf32>,
    %c5_i32 = arith.constant 5 : i32
    %169 = arith.addi %3, %c5_i32 : i32
    %170 = arith.index_cast %169 : i32 to index
    %171 = memref.load %arg1[%170] : memref<16xi32, #tpu.memory_space<smem>>
    %172 = arith.index_cast %171 : i32 to index
    %c0_139 = arith.constant 0 : index
    %173 = vector.load %arg2[%172, %c0_139] : memref<64x128xf32, #tpu.memory_space<vmem>>, vector<1x128xf32>
    %c0_140 = arith.constant 0 : index
    %c0_141 = arith.constant 0 : index
    %c0_142 = arith.constant 0 : index
    %174 = vector.load %arg10[%c0_140, %c0_141, %c0_142] : memref<2x1x128xf32, #tpu.memory_space<vmem>>, vector<1x1x128xf32>
    %175 = vector.shape_cast %174 : vector<1x1x128xf32> to vector<1x128xf32>
    %176 = arith.addf %173, %175 : vector<1x128xf32>
    %c0_143 = arith.constant 0 : index
    %c0_144 = arith.constant 0 : index
    %c0_145 = arith.constant 0 : index
    %177 = vector.load %arg3[%c0_143, %c0_144, %c0_145] : memref<2x128x128xf32, #tpu.memory_space<vmem>>, vector<1x128x128xf32>
    %178 = vector.shape_cast %177 : vector<1x128x128xf32> to vector<128x128xf32>
    %cst_146 = arith.constant dense<0.000000e+00> : vector<1x128xf32>
    %179 = tpu.matmul %176, %178, %cst_146 {dimension_numbers = #tpu.dot_dimension_numbers<[1], [0], [0], [1], [0, 0, 1, 1], [], []>} : vector<1x128xf32>, vector<128x128xf32>, vector<1x128xf32> -> vector<1x128xf32>
    %c0_147 = arith.constant 0 : index
    %c0_148 = arith.constant 0 : index
    %c0_149 = arith.constant 0 : index
    %180 = vector.load %arg4[%c0_147, %c0_148, %c0_149] : memref<2x1x128xf32, #tpu.memory_space<vmem>>, vector<1x1x128xf32>
    %181 = vector.shape_cast %180 : vector<1x1x128xf32> to vector<1x128xf32>
    %182 = arith.addf %179, %181 : vector<1x128xf32>
    %183 = math.tanh %182 : vector<1x128xf32>
    %c0_150 = arith.constant 0 : index
    %c0_151 = arith.constant 0 : index
    %c0_152 = arith.constant 0 : index
    %184 = vector.load %arg10[%c0_150, %c0_151, %c0_152] : memref<2x1x128xf32, #tpu.memory_space<vmem>>, vector<1x1x128xf32>
    %185 = vector.shape_cast %184 : vector<1x1x128xf32> to vector<1x128xf32>
    %186 = vector.shape_cast %183 : vector<1x128xf32> to vector<1x1x128xf32>
    tpu.vector_store %arg10[%c0_150, %c0_151, %c0_152], %186 {strides = array<i32>} : memref<2x1x128xf32, #tpu.memory_space<vmem>>, vector<1x1x128xf32>,
    %c1_153 = arith.constant 1 : index
    %c0_154 = arith.constant 0 : index
    %c0_155 = arith.constant 0 : index
    %187 = vector.load %arg10[%c1_153, %c0_154, %c0_155] : memref<2x1x128xf32, #tpu.memory_space<vmem>>, vector<1x1x128xf32>
    %188 = vector.shape_cast %187 : vector<1x1x128xf32> to vector<1x128xf32>
    %189 = arith.addf %183, %188 : vector<1x128xf32>
    %c1_156 = arith.constant 1 : index
    %c0_157 = arith.constant 0 : index
    %c0_158 = arith.constant 0 : index
    %190 = vector.load %arg3[%c1_156, %c0_157, %c0_158] : memref<2x128x128xf32, #tpu.memory_space<vmem>>, vector<1x128x128xf32>
    %191 = vector.shape_cast %190 : vector<1x128x128xf32> to vector<128x128xf32>
    %cst_159 = arith.constant dense<0.000000e+00> : vector<1x128xf32>
    %192 = tpu.matmul %189, %191, %cst_159 {dimension_numbers = #tpu.dot_dimension_numbers<[1], [0], [0], [1], [0, 0, 1, 1], [], []>} : vector<1x128xf32>, vector<128x128xf32>, vector<1x128xf32> -> vector<1x128xf32>
    %c1_160 = arith.constant 1 : index
    %c0_161 = arith.constant 0 : index
    %c0_162 = arith.constant 0 : index
    %193 = vector.load %arg4[%c1_160, %c0_161, %c0_162] : memref<2x1x128xf32, #tpu.memory_space<vmem>>, vector<1x1x128xf32>
    %194 = vector.shape_cast %193 : vector<1x1x128xf32> to vector<1x128xf32>
    %195 = arith.addf %192, %194 : vector<1x128xf32>
    %196 = math.tanh %195 : vector<1x128xf32>
    %c1_163 = arith.constant 1 : index
    %c0_164 = arith.constant 0 : index
    %c0_165 = arith.constant 0 : index
    %197 = vector.load %arg10[%c1_163, %c0_164, %c0_165] : memref<2x1x128xf32, #tpu.memory_space<vmem>>, vector<1x1x128xf32>
    %198 = vector.shape_cast %197 : vector<1x1x128xf32> to vector<1x128xf32>
    %199 = vector.shape_cast %196 : vector<1x128xf32> to vector<1x1x128xf32>
    tpu.vector_store %arg10[%c1_163, %c0_164, %c0_165], %199 {strides = array<i32>} : memref<2x1x128xf32, #tpu.memory_space<vmem>>, vector<1x1x128xf32>,
    %200 = arith.index_cast %169 : i32 to index
    %c0_166 = arith.constant 0 : index
    %201 = vector.load %arg11[%200, %c0_166] : memref<16x128xf32, #tpu.memory_space<vmem>>, vector<1x128xf32>
    tpu.vector_store %arg11[%200, %c0_166], %196 {strides = array<i32>} : memref<16x128xf32, #tpu.memory_space<vmem>>, vector<1x128xf32>,
    %c6_i32 = arith.constant 6 : i32
    %202 = arith.addi %3, %c6_i32 : i32
    %203 = arith.index_cast %202 : i32 to index
    %204 = memref.load %arg1[%203] : memref<16xi32, #tpu.memory_space<smem>>
    %205 = arith.index_cast %204 : i32 to index
    %c0_167 = arith.constant 0 : index
    %206 = vector.load %arg2[%205, %c0_167] : memref<64x128xf32, #tpu.memory_space<vmem>>, vector<1x128xf32>
    %c0_168 = arith.constant 0 : index
    %c0_169 = arith.constant 0 : index
    %c0_170 = arith.constant 0 : index
    %207 = vector.load %arg10[%c0_168, %c0_169, %c0_170] : memref<2x1x128xf32, #tpu.memory_space<vmem>>, vector<1x1x128xf32>
    %208 = vector.shape_cast %207 : vector<1x1x128xf32> to vector<1x128xf32>
    %209 = arith.addf %206, %208 : vector<1x128xf32>
    %c0_171 = arith.constant 0 : index
    %c0_172 = arith.constant 0 : index
    %c0_173 = arith.constant 0 : index
    %210 = vector.load %arg3[%c0_171, %c0_172, %c0_173] : memref<2x128x128xf32, #tpu.memory_space<vmem>>, vector<1x128x128xf32>
    %211 = vector.shape_cast %210 : vector<1x128x128xf32> to vector<128x128xf32>
    %cst_174 = arith.constant dense<0.000000e+00> : vector<1x128xf32>
    %212 = tpu.matmul %209, %211, %cst_174 {dimension_numbers = #tpu.dot_dimension_numbers<[1], [0], [0], [1], [0, 0, 1, 1], [], []>} : vector<1x128xf32>, vector<128x128xf32>, vector<1x128xf32> -> vector<1x128xf32>
    %c0_175 = arith.constant 0 : index
    %c0_176 = arith.constant 0 : index
    %c0_177 = arith.constant 0 : index
    %213 = vector.load %arg4[%c0_175, %c0_176, %c0_177] : memref<2x1x128xf32, #tpu.memory_space<vmem>>, vector<1x1x128xf32>
    %214 = vector.shape_cast %213 : vector<1x1x128xf32> to vector<1x128xf32>
    %215 = arith.addf %212, %214 : vector<1x128xf32>
    %216 = math.tanh %215 : vector<1x128xf32>
    %c0_178 = arith.constant 0 : index
    %c0_179 = arith.constant 0 : index
    %c0_180 = arith.constant 0 : index
    %217 = vector.load %arg10[%c0_178, %c0_179, %c0_180] : memref<2x1x128xf32, #tpu.memory_space<vmem>>, vector<1x1x128xf32>
    %218 = vector.shape_cast %217 : vector<1x1x128xf32> to vector<1x128xf32>
    %219 = vector.shape_cast %216 : vector<1x128xf32> to vector<1x1x128xf32>
    tpu.vector_store %arg10[%c0_178, %c0_179, %c0_180], %219 {strides = array<i32>} : memref<2x1x128xf32, #tpu.memory_space<vmem>>, vector<1x1x128xf32>,
    %c1_181 = arith.constant 1 : index
    %c0_182 = arith.constant 0 : index
    %c0_183 = arith.constant 0 : index
    %220 = vector.load %arg10[%c1_181, %c0_182, %c0_183] : memref<2x1x128xf32, #tpu.memory_space<vmem>>, vector<1x1x128xf32>
    %221 = vector.shape_cast %220 : vector<1x1x128xf32> to vector<1x128xf32>
    %222 = arith.addf %216, %221 : vector<1x128xf32>
    %c1_184 = arith.constant 1 : index
    %c0_185 = arith.constant 0 : index
    %c0_186 = arith.constant 0 : index
    %223 = vector.load %arg3[%c1_184, %c0_185, %c0_186] : memref<2x128x128xf32, #tpu.memory_space<vmem>>, vector<1x128x128xf32>
    %224 = vector.shape_cast %223 : vector<1x128x128xf32> to vector<128x128xf32>
    %cst_187 = arith.constant dense<0.000000e+00> : vector<1x128xf32>
    %225 = tpu.matmul %222, %224, %cst_187 {dimension_numbers = #tpu.dot_dimension_numbers<[1], [0], [0], [1], [0, 0, 1, 1], [], []>} : vector<1x128xf32>, vector<128x128xf32>, vector<1x128xf32> -> vector<1x128xf32>
    %c1_188 = arith.constant 1 : index
    %c0_189 = arith.constant 0 : index
    %c0_190 = arith.constant 0 : index
    %226 = vector.load %arg4[%c1_188, %c0_189, %c0_190] : memref<2x1x128xf32, #tpu.memory_space<vmem>>, vector<1x1x128xf32>
    %227 = vector.shape_cast %226 : vector<1x1x128xf32> to vector<1x128xf32>
    %228 = arith.addf %225, %227 : vector<1x128xf32>
    %229 = math.tanh %228 : vector<1x128xf32>
    %c1_191 = arith.constant 1 : index
    %c0_192 = arith.constant 0 : index
    %c0_193 = arith.constant 0 : index
    %230 = vector.load %arg10[%c1_191, %c0_192, %c0_193] : memref<2x1x128xf32, #tpu.memory_space<vmem>>, vector<1x1x128xf32>
    %231 = vector.shape_cast %230 : vector<1x1x128xf32> to vector<1x128xf32>
    %232 = vector.shape_cast %229 : vector<1x128xf32> to vector<1x1x128xf32>
    tpu.vector_store %arg10[%c1_191, %c0_192, %c0_193], %232 {strides = array<i32>} : memref<2x1x128xf32, #tpu.memory_space<vmem>>, vector<1x1x128xf32>,
    %233 = arith.index_cast %202 : i32 to index
    %c0_194 = arith.constant 0 : index
    %234 = vector.load %arg11[%233, %c0_194] : memref<16x128xf32, #tpu.memory_space<vmem>>, vector<1x128xf32>
    tpu.vector_store %arg11[%233, %c0_194], %229 {strides = array<i32>} : memref<16x128xf32, #tpu.memory_space<vmem>>, vector<1x128xf32>,
    %c7_i32 = arith.constant 7 : i32
    %235 = arith.addi %3, %c7_i32 : i32
    %236 = arith.index_cast %235 : i32 to index
    %237 = memref.load %arg1[%236] : memref<16xi32, #tpu.memory_space<smem>>
    %238 = arith.index_cast %237 : i32 to index
    %c0_195 = arith.constant 0 : index
    %239 = vector.load %arg2[%238, %c0_195] : memref<64x128xf32, #tpu.memory_space<vmem>>, vector<1x128xf32>
    %c0_196 = arith.constant 0 : index
    %c0_197 = arith.constant 0 : index
    %c0_198 = arith.constant 0 : index
    %240 = vector.load %arg10[%c0_196, %c0_197, %c0_198] : memref<2x1x128xf32, #tpu.memory_space<vmem>>, vector<1x1x128xf32>
    %241 = vector.shape_cast %240 : vector<1x1x128xf32> to vector<1x128xf32>
    %242 = arith.addf %239, %241 : vector<1x128xf32>
    %c0_199 = arith.constant 0 : index
    %c0_200 = arith.constant 0 : index
    %c0_201 = arith.constant 0 : index
    %243 = vector.load %arg3[%c0_199, %c0_200, %c0_201] : memref<2x128x128xf32, #tpu.memory_space<vmem>>, vector<1x128x128xf32>
    %244 = vector.shape_cast %243 : vector<1x128x128xf32> to vector<128x128xf32>
    %cst_202 = arith.constant dense<0.000000e+00> : vector<1x128xf32>
    %245 = tpu.matmul %242, %244, %cst_202 {dimension_numbers = #tpu.dot_dimension_numbers<[1], [0], [0], [1], [0, 0, 1, 1], [], []>} : vector<1x128xf32>, vector<128x128xf32>, vector<1x128xf32> -> vector<1x128xf32>
    %c0_203 = arith.constant 0 : index
    %c0_204 = arith.constant 0 : index
    %c0_205 = arith.constant 0 : index
    %246 = vector.load %arg4[%c0_203, %c0_204, %c0_205] : memref<2x1x128xf32, #tpu.memory_space<vmem>>, vector<1x1x128xf32>
    %247 = vector.shape_cast %246 : vector<1x1x128xf32> to vector<1x128xf32>
    %248 = arith.addf %245, %247 : vector<1x128xf32>
    %249 = math.tanh %248 : vector<1x128xf32>
    %c0_206 = arith.constant 0 : index
    %c0_207 = arith.constant 0 : index
    %c0_208 = arith.constant 0 : index
    %250 = vector.load %arg10[%c0_206, %c0_207, %c0_208] : memref<2x1x128xf32, #tpu.memory_space<vmem>>, vector<1x1x128xf32>
    %251 = vector.shape_cast %250 : vector<1x1x128xf32> to vector<1x128xf32>
    %252 = vector.shape_cast %249 : vector<1x128xf32> to vector<1x1x128xf32>
    tpu.vector_store %arg10[%c0_206, %c0_207, %c0_208], %252 {strides = array<i32>} : memref<2x1x128xf32, #tpu.memory_space<vmem>>, vector<1x1x128xf32>,
    %c1_209 = arith.constant 1 : index
    %c0_210 = arith.constant 0 : index
    %c0_211 = arith.constant 0 : index
    %253 = vector.load %arg10[%c1_209, %c0_210, %c0_211] : memref<2x1x128xf32, #tpu.memory_space<vmem>>, vector<1x1x128xf32>
    %254 = vector.shape_cast %253 : vector<1x1x128xf32> to vector<1x128xf32>
    %255 = arith.addf %249, %254 : vector<1x128xf32>
    %c1_212 = arith.constant 1 : index
    %c0_213 = arith.constant 0 : index
    %c0_214 = arith.constant 0 : index
    %256 = vector.load %arg3[%c1_212, %c0_213, %c0_214] : memref<2x128x128xf32, #tpu.memory_space<vmem>>, vector<1x128x128xf32>
    %257 = vector.shape_cast %256 : vector<1x128x128xf32> to vector<128x128xf32>
    %cst_215 = arith.constant dense<0.000000e+00> : vector<1x128xf32>
    %258 = tpu.matmul %255, %257, %cst_215 {dimension_numbers = #tpu.dot_dimension_numbers<[1], [0], [0], [1], [0, 0, 1, 1], [], []>} : vector<1x128xf32>, vector<128x128xf32>, vector<1x128xf32> -> vector<1x128xf32>
    %c1_216 = arith.constant 1 : index
    %c0_217 = arith.constant 0 : index
    %c0_218 = arith.constant 0 : index
    %259 = vector.load %arg4[%c1_216, %c0_217, %c0_218] : memref<2x1x128xf32, #tpu.memory_space<vmem>>, vector<1x1x128xf32>
    %260 = vector.shape_cast %259 : vector<1x1x128xf32> to vector<1x128xf32>
    %261 = arith.addf %258, %260 : vector<1x128xf32>
    %262 = math.tanh %261 : vector<1x128xf32>
    %c1_219 = arith.constant 1 : index
    %c0_220 = arith.constant 0 : index
    %c0_221 = arith.constant 0 : index
    %263 = vector.load %arg10[%c1_219, %c0_220, %c0_221] : memref<2x1x128xf32, #tpu.memory_space<vmem>>, vector<1x1x128xf32>
    %264 = vector.shape_cast %263 : vector<1x1x128xf32> to vector<1x128xf32>
    %265 = vector.shape_cast %262 : vector<1x128xf32> to vector<1x1x128xf32>
    tpu.vector_store %arg10[%c1_219, %c0_220, %c0_221], %265 {strides = array<i32>} : memref<2x1x128xf32, #tpu.memory_space<vmem>>, vector<1x1x128xf32>,
    %266 = arith.index_cast %235 : i32 to index
    %c0_222 = arith.constant 0 : index
    %267 = vector.load %arg11[%266, %c0_222] : memref<16x128xf32, #tpu.memory_space<vmem>>, vector<1x128xf32>
    tpu.vector_store %arg11[%266, %c0_222], %262 {strides = array<i32>} : memref<16x128xf32, #tpu.memory_space<vmem>>, vector<1x128xf32>,
    %c1_i32_223 = arith.constant 1 : i32
    %268 = arith.cmpi eq, %arg0, %c1_i32_223 : i32
    %269 = arith.extui %268 : i1 to i32
    %c0_i32_224 = arith.constant 0 : i32
    %270 = arith.cmpi ne, %269, %c0_i32_224 : i32
    scf.if %270 {
      %c0_225 = arith.constant 0 : index
      %c0_226 = arith.constant 0 : index
      %271 = vector.load %arg11[%c0_225, %c0_226] : memref<16x128xf32, #tpu.memory_space<vmem>>, vector<16x128xf32>
      %c0_227 = arith.constant 0 : index
      %c0_228 = arith.constant 0 : index
      %272 = vector.load %arg5[%c0_227, %c0_228] : memref<128x128xf32, #tpu.memory_space<vmem>>, vector<128x128xf32>
      %cst_229 = arith.constant dense<0.000000e+00> : vector<16x128xf32>
      %273 = tpu.matmul %271, %272, %cst_229 {dimension_numbers = #tpu.dot_dimension_numbers<[1], [0], [0], [1], [0, 0, 1, 1], [], []>} : vector<16x128xf32>, vector<128x128xf32>, vector<16x128xf32> -> vector<16x128xf32>
      %c0_230 = arith.constant 0 : index
      %c0_231 = arith.constant 0 : index
      %274 = vector.load %arg6[%c0_230, %c0_231] : memref<1x128xf32, #tpu.memory_space<vmem>>, vector<1x128xf32>
      %275 = vector.broadcast %274 : vector<1x128xf32> to vector<16x128xf32>
      %276 = arith.addf %273, %275 : vector<16x128xf32>
      %c0_232 = arith.constant 0 : index
      %c0_233 = arith.constant 0 : index
      %277 = vector.load %arg8[%c0_232, %c0_233] : memref<16x128xf32, #tpu.memory_space<vmem>>, vector<16x128xf32>
      tpu.vector_store %arg8[%c0_232, %c0_233], %276 {strides = array<i32>} : memref<16x128xf32, #tpu.memory_space<vmem>>, vector<16x128xf32>,
      %c0_234 = arith.constant 0 : index
      %c0_235 = arith.constant 0 : index
      %c0_236 = arith.constant 0 : index
      %278 = vector.load %arg10[%c0_234, %c0_235, %c0_236] : memref<2x1x128xf32, #tpu.memory_space<vmem>>, vector<2x1x128xf32>
      %c0_237 = arith.constant 0 : index
      %c0_238 = arith.constant 0 : index
      %c0_239 = arith.constant 0 : index
      %279 = vector.load %arg9[%c0_237, %c0_238, %c0_239] : memref<2x1x128xf32, #tpu.memory_space<vmem>>, vector<2x1x128xf32>
      tpu.vector_store %arg9[%c0_237, %c0_238, %c0_239], %278 {strides = array<i32>} : memref<2x1x128xf32, #tpu.memory_space<vmem>>, vector<2x1x128xf32>,
    } else {
    }
    return
  }
  func.func @transform_0(%arg0: i32, %arg1: memref<16xi32, #tpu.memory_space<smem>>) -> (i32, i32) {
    %c0_i32 = arith.constant 0 : i32
    %c0_i32_0 = arith.constant 0 : i32
    %c0_i32_1 = arith.constant 0 : i32
    return %c0_i32, %c0_i32_0 : i32, i32
  }
  func.func @transform_1(%arg0: i32, %arg1: memref<16xi32, #tpu.memory_space<smem>>) -> (i32, i32, i32) {
    %c0_i32 = arith.constant 0 : i32
    %c0_i32_0 = arith.constant 0 : i32
    %c0_i32_1 = arith.constant 0 : i32
    %c0_i32_2 = arith.constant 0 : i32
    return %c0_i32, %c0_i32_0, %c0_i32_1 : i32, i32, i32
  }
  func.func @transform_2(%arg0: i32, %arg1: memref<16xi32, #tpu.memory_space<smem>>) -> (i32, i32, i32) {
    %c0_i32 = arith.constant 0 : i32
    %c0_i32_0 = arith.constant 0 : i32
    %c0_i32_1 = arith.constant 0 : i32
    %c0_i32_2 = arith.constant 0 : i32
    return %c0_i32, %c0_i32_0, %c0_i32_1 : i32, i32, i32
  }
  func.func @transform_3(%arg0: i32, %arg1: memref<16xi32, #tpu.memory_space<smem>>) -> (i32, i32) {
    %c0_i32 = arith.constant 0 : i32
    %c0_i32_0 = arith.constant 0 : i32
    %c0_i32_1 = arith.constant 0 : i32
    return %c0_i32, %c0_i32_0 : i32, i32
  }
  func.func @transform_4(%arg0: i32, %arg1: memref<16xi32, #tpu.memory_space<smem>>) -> (i32, i32) {
    %c0_i32 = arith.constant 0 : i32
    %c0_i32_0 = arith.constant 0 : i32
    %c0_i32_1 = arith.constant 0 : i32
    return %c0_i32, %c0_i32_0 : i32, i32
  }
  func.func @transform_5(%arg0: i32, %arg1: memref<16xi32, #tpu.memory_space<smem>>) -> (i32, i32, i32) {
    %c0_i32 = arith.constant 0 : i32
    %c0_i32_0 = arith.constant 0 : i32
    %c0_i32_1 = arith.constant 0 : i32
    %c0_i32_2 = arith.constant 0 : i32
    return %c0_i32, %c0_i32_0, %c0_i32_1 : i32, i32, i32
  }
  func.func @transform_6(%arg0: i32, %arg1: memref<16xi32, #tpu.memory_space<smem>>) -> (i32, i32) {
    %c0_i32 = arith.constant 0 : i32
    %c0_i32_0 = arith.constant 0 : i32
    %c0_i32_1 = arith.constant 0 : i32
    return %c0_i32, %c0_i32_0 : i32, i32
  }
  func.func @transform_7(%arg0: i32, %arg1: memref<16xi32, #tpu.memory_space<smem>>) -> (i32, i32, i32) {
    %c0_i32 = arith.constant 0 : i32
    %c0_i32_0 = arith.constant 0 : i32
    %c0_i32_1 = arith.constant 0 : i32
    %c0_i32_2 = arith.constant 0 : i32
    return %c0_i32, %c0_i32_0, %c0_i32_1 : i32, i32, i32
  }
}

</mosaic_0001>

<llo_original>
// kernel: tpu_custom_call.1
$region0: #{tpu_custom_call.1}
  #allocation0 [shape = 'u32[]', space=smem, size = 0x4, offset = 0x4, fixed_abs, tag = 'smem constant byte address 0x4 - core index']
  #allocation1 [shape = 'u32[144,128]{1,0:T(1,128)}', space=vmem, size = 0x12000, scoped, tag = 'internal scratch']
  #allocation2 [shape = 'f32[2,1,128]{2,1,0:T(1,128)}', space=vmem, size = 0x400, scoped, tag = 'scratch operand']
  #allocation3 [shape = 'f32[16,128]{1,0:T(8,128)}', space=vmem, size = 0x2000, scoped, tag = 'scratch operand']
  #allocation4 [shape = 's32[1]{0}', space=sflag, size = 0x4, scoped, tag = 'scoped memory for tpu_custom_call.1']
  #allocation5 [shape = 'u8[512]{0}', space=smem, size = 0x200, scoped, tag = 'prefetched SMEM operand 0']
  %s0 = inlined_call_operand.hbm [shape: s32[16], index: 0, kind: input, shape index: {}]
  %s1 = inlined_call_operand.hbm [shape: f32[64,128], index: 1, kind: input, shape index: {}]
  %s2 = inlined_call_operand.hbm [shape: f32[2,128,128], index: 2, kind: input, shape index: {}]
  %s3 = inlined_call_operand.vmem [shape: f32[2,1,128], index: 3, kind: input, shape index: {}]
  %s4 = inlined_call_operand.hbm [shape: f32[128,128], index: 4, kind: input, shape index: {}]
  %s5 = inlined_call_operand.vmem [shape: f32[1,128], index: 5, kind: input, shape index: {}]
  %s6 = inlined_call_operand.vmem [shape: f32[2,1,128], index: 6, kind: input, shape index: {}]
  %s7 = inlined_call_operand.hbm [shape: f32[16,128], index: 7, kind: output, shape index: {0}]
  %s8 = inlined_call_operand.hbm [shape: f32[2,1,128], index: 8, kind: output, shape index: {1}]
  %9 = xla_tuple %s7, %s8
  %s10 = sld [smem:[#allocation0]]
  $region85: #{tpu_custom_call.1} parent=0
    _
  %s12 = ssub.s32 1, %s10
  %s13 = scalar_select 0, %s12, %s10
  %15 = dma.hbm_to_smem %s0, 16, [#allocation5], [#allocation4]
  %16 = dma.done [#allocation4], 16
  %17 = sfence
  $region1: #{tpu_custom_call.1} parent=0
    #allocation6 [shape = 'u8[32768]{0}', space=vmem, size = 0x8000, scoped, tag = 'input window, operand 1, single buffered']
    #allocation7 [shape = 's32[2]{0}', space=sflag, size = 0x8, scoped, tag = 'scoped memory for tpu_custom_call.1']
    #allocation8 [shape = 's32[2]{0}', space=sflag, size = 0x8, scoped, tag = 'scoped memory for tpu_custom_call.1']
    #allocation9 [shape = 'u8[131072]{0}', space=vmem, size = 0x20000, scoped, tag = 'input window, operand 2, single buffered']
    #allocation10 [shape = 's32[1]{0}', space=sflag, size = 0x4, scoped, tag = 'scoped memory for tpu_custom_call.1']
    #allocation11 [shape = 'u8[65536]{0}', space=vmem, size = 0x10000, scoped, tag = 'input window, operand 4, single buffered']
    #allocation12 [shape = 'u8[8192]{0}', space=vmem, size = 0x2000, scoped, tag = 'output window, operand 0, single buffered']
    #allocation13 [shape = 'u8[1024]{0}', space=vmem, size = 0x400, scoped, tag = 'output window, operand 1, single buffered']
    #allocation14 [shape = 's32[1]{0}', space=sflag, size = 0x4, scoped, tag = 'scoped memory for tpu_custom_call.1']
    %18 = vsyncpa [#allocation7], 0
    %19 = vsyncpa [#allocation10], 0
    %20 = vsyncpa [#allocation8], 0
    %21 = vsyncpa [#allocation14], 0
    loop: start=0, step=1, limit=4
    $region2: #{tpu_custom_call.1} parent=1 // loop_pre_header
      _
    $region3: #{tpu_custom_call.1} parent=1 // loop_header
      %s23 = sphi 0, %s27
      %p24 = scmp.ge.s32.totalorder %s23, 4
      %s31 = sphi 0, %s31
      %s33 = sphi 0, %s31
      %s34 = sphi 0, %s33
      %s48 = sphi 0, %s34
      %s52 = sphi 0, %s52
      %s54 = sphi 0, %s52
      %s55 = sphi 0, %s54
      %s69 = sphi 0, %s55
      %s73 = sphi 0, %s73
      %s75 = sphi 0, %s73
      %s76 = sphi 0, %s75
      %s90 = sphi 0, %s76
      %s94 = sphi 0, %s94
      %s96 = sphi 0, %s94
      %s97 = sphi 0, %s96
      %s111 = sphi 0, %s97
      %s115 = sphi 0, %s115
      %s117 = sphi 0, %s115
      %s118 = sphi 0, %s117
      %s132 = sphi 0, %s118
      %s136 = sphi 0, %s136
      %s138 = sphi 0, %s136
      %s139 = sphi 0, %s138
      %s153 = sphi 0, %s139
      %s157 = sphi 0, %s157
      %s159 = sphi 0, %s157
      %s160 = sphi 0, %s159
      %s174 = sphi 0, %s160
      %s178 = sphi 0, %s178
      %s180 = sphi 0, %s178
      %s181 = sphi 0, %s180
      %s195 = sphi 0, %s181
    $region4: #{tpu_custom_call.1} parent=1 // loop_header_branch
      %26 = sbr.rel (%p24) target = $region8
    $region5: #{tpu_custom_call.1} parent=1 // loop_body
      %s28 = ssub.s32 %s23, 1
      %s29 = ssub.s32 %s23, 2
      %s30 = sadd.s32 %s23, 1
      %s32 = sadd.s32 %s31, 1
      %p35 = scmp.eq.s32.totalorder %s23, 1
      %p36 = scmp.ne.s32.totalorder %s31, %s33
      %p37 = scmp.eq.s32.totalorder %s23, 0
      %p38 = por %p36, %p37
      %p39 = scmp.ne.s32.totalorder %s31, %s33
      %p40 = scmp.eq.s32.totalorder %s28, 1
      %p41 = por %p39, %p40
      %p42 = scmp.ne.s32.totalorder %s33, %s34
      %p43 = scmp.eq.s32.totalorder %s28, 0
      %p44 = por %p42, %p43
      %p45 = scmp.ne.s32.totalorder %s33, %s34
      %p46 = scmp.eq.s32.totalorder %s29, 1
      %p47 = por %p45, %p46
      %p49 = scmp.ne.s32.totalorder %s34, %s48
      %p50 = scmp.eq.s32.totalorder %s29, 0
      %p51 = por %p49, %p50
      %s53 = sadd.s32 %s52, 1
      %p56 = scmp.eq.s32.totalorder %s23, 1
      %p57 = scmp.ne.s32.totalorder %s52, %s54
      %p58 = scmp.eq.s32.totalorder %s23, 0
      %p59 = por %p57, %p58
      %p60 = scmp.ne.s32.totalorder %s52, %s54
      %p61 = scmp.eq.s32.totalorder %s28, 1
      %p62 = por %p60, %p61
      %p63 = scmp.ne.s32.totalorder %s54, %s55
      %p64 = scmp.eq.s32.totalorder %s28, 0
      %p65 = por %p63, %p64
      %p66 = scmp.ne.s32.totalorder %s54, %s55
      %p67 = scmp.eq.s32.totalorder %s29, 1
      %p68 = por %p66, %p67
      %p70 = scmp.ne.s32.totalorder %s55, %s69
      %p71 = scmp.eq.s32.totalorder %s29, 0
      %p72 = por %p70, %p71
      %s74 = sadd.s32 %s73, 1
      %p77 = scmp.eq.s32.totalorder %s23, 1
      %p78 = scmp.ne.s32.totalorder %s73, %s75
      %p79 = scmp.eq.s32.totalorder %s23, 0
      %p80 = por %p78, %p79
      %p81 = scmp.ne.s32.totalorder %s73, %s75
      %p82 = scmp.eq.s32.totalorder %s28, 1
      %p83 = por %p81, %p82
      %p84 = scmp.ne.s32.totalorder %s75, %s76
      %p85 = scmp.eq.s32.totalorder %s28, 0
      %p86 = por %p84, %p85
      %p87 = scmp.ne.s32.totalorder %s75, %s76
      %p88 = scmp.eq.s32.totalorder %s29, 1
      %p89 = por %p87, %p88
      %p91 = scmp.ne.s32.totalorder %s76, %s90
      %p92 = scmp.eq.s32.totalorder %s29, 0
      %p93 = por %p91, %p92
      %s95 = sadd.s32 %s94, 1
      %p98 = scmp.eq.s32.totalorder %s23, 1
      %p99 = scmp.ne.s32.totalorder %s94, %s96
      %p100 = scmp.eq.s32.totalorder %s23, 0
      %p101 = por %p99, %p100
      %p102 = scmp.ne.s32.totalorder %s94, %s96
      %p103 = scmp.eq.s32.totalorder %s28, 1
      %p104 = por %p102, %p103
      %p105 = scmp.ne.s32.totalorder %s96, %s97
      %p106 = scmp.eq.s32.totalorder %s28, 0
      %p107 = por %p105, %p106
      %p108 = scmp.ne.s32.totalorder %s96, %s97
      %p109 = scmp.eq.s32.totalorder %s29, 1
      %p110 = por %p108, %p109
      %p112 = scmp.ne.s32.totalorder %s97, %s111
      %p113 = scmp.eq.s32.totalorder %s29, 0
      %p114 = por %p112, %p113
      %s116 = sadd.s32 %s115, 1
      %p119 = scmp.eq.s32.totalorder %s23, 1
      %p120 = scmp.ne.s32.totalorder %s115, %s117
      %p121 = scmp.eq.s32.totalorder %s23, 0
      %p122 = por %p120, %p121
      %p123 = scmp.ne.s32.totalorder %s115, %s117
      %p124 = scmp.eq.s32.totalorder %s28, 1
      %p125 = por %p123, %p124
      %p126 = scmp.ne.s32.totalorder %s117, %s118
      %p127 = scmp.eq.s32.totalorder %s28, 0
      %p128 = por %p126, %p127
      %p129 = scmp.ne.s32.totalorder %s117, %s118
      %p130 = scmp.eq.s32.totalorder %s29, 1
      %p131 = por %p129, %p130
      %p133 = scmp.ne.s32.totalorder %s118, %s132
      %p134 = scmp.eq.s32.totalorder %s29, 0
      %p135 = por %p133, %p134
      %s137 = sadd.s32 %s136, 1
      %p140 = scmp.eq.s32.totalorder %s23, 1
      %p141 = scmp.ne.s32.totalorder %s136, %s138
      %p142 = scmp.eq.s32.totalorder %s23, 0
      %p143 = por %p141, %p142
      %p144 = scmp.ne.s32.totalorder %s136, %s138
      %p145 = scmp.eq.s32.totalorder %s28, 1
      %p146 = por %p144, %p145
      %p147 = scmp.ne.s32.totalorder %s138, %s139
      %p148 = scmp.eq.s32.totalorder %s28, 0
      %p149 = por %p147, %p148
      %p150 = scmp.ne.s32.totalorder %s138, %s139
      %p151 = scmp.eq.s32.totalorder %s29, 1
      %p152 = por %p150, %p151
      %p154 = scmp.ne.s32.totalorder %s139, %s153
      %p155 = scmp.eq.s32.totalorder %s29, 0
      %p156 = por %p154, %p155
      %s158 = sadd.s32 %s157, 1
      %p161 = scmp.eq.s32.totalorder %s23, 1
      %p162 = scmp.ne.s32.totalorder %s157, %s159
      %p163 = scmp.eq.s32.totalorder %s23, 0
      %p164 = por %p162, %p163
      %p165 = scmp.ne.s32.totalorder %s157, %s159
      %p166 = scmp.eq.s32.totalorder %s28, 1
      %p167 = por %p165, %p166
      %p168 = scmp.ne.s32.totalorder %s159, %s160
      %p169 = scmp.eq.s32.totalorder %s28, 0
      %p170 = por %p168, %p169
      %p171 = scmp.ne.s32.totalorder %s159, %s160
      %p172 = scmp.eq.s32.totalorder %s29, 1
      %p173 = por %p171, %p172
      %p175 = scmp.ne.s32.totalorder %s160, %s174
      %p176 = scmp.eq.s32.totalorder %s29, 0
      %p177 = por %p175, %p176
      %s179 = sadd.s32 %s178, 1
      %p182 = scmp.eq.s32.totalorder %s23, 1
      %p183 = scmp.ne.s32.totalorder %s178, %s180
      %p184 = scmp.eq.s32.totalorder %s23, 0
      %p185 = por %p183, %p184
      %p186 = scmp.ne.s32.totalorder %s178, %s180
      %p187 = scmp.eq.s32.totalorder %s28, 1
      %p188 = por %p186, %p187
      %p189 = scmp.ne.s32.totalorder %s180, %s181
      %p190 = scmp.eq.s32.totalorder %s28, 0
      %p191 = por %p189, %p190
      %p192 = scmp.ne.s32.totalorder %s180, %s181
      %p193 = scmp.eq.s32.totalorder %s29, 1
      %p194 = por %p192, %p193
      %p196 = scmp.ne.s32.totalorder %s181, %s195
      %p197 = scmp.eq.s32.totalorder %s29, 0
      %p198 = por %p196, %p197
      %p199 = scmp.le.s32.totalorder 1, %s23
      %p200 = scmp.lt.s32.totalorder %s23, 3
      %p201 = pnand %p199, %p200
      %p202 = pneg %p201
      // Predicated region
      $region9: #{tpu_custom_call.1} parent=5 // pred_check
        _
      $region10: #{tpu_custom_call.1} parent=5 // pred_check_branch
        %204 = sbr.rel (%p201) target = $region12
      $region11: #{tpu_custom_call.1} parent=5 // pred_region
        %s205 = ssub.s32 %s23, 1
        // Predicated region
        $region13: #{tpu_custom_call.1} parent=11 // pred_check
          %p206 = pneg %p44
        $region14: #{tpu_custom_call.1} parent=11 // pred_check_branch
          %208 = sbr.rel (%p206) target = $region16
        $region15: #{tpu_custom_call.1} parent=11 // pred_region
          %s210 = ssub.s32 1024, 1024
          %211 = vsyncadd [#allocation7], %s210
          %s212 = sshll.u32 [#allocation6], 4
          %s213 = int_to_ptr.vmem [resolvable:$true] %s212
          %218 = dma.hbm_to_vmem [thread:$0]  %s1, 1024, %s213, [#allocation7], 128, 128, 8
        $region16: #{tpu_custom_call.1} parent=11 // pred_fallthru
          _
        // Predicated region
        $region17: #{tpu_custom_call.1} parent=11 // pred_check
          %p219 = pneg %p65
        $region18: #{tpu_custom_call.1} parent=11 // pred_check_branch
          %221 = sbr.rel (%p219) target = $region20
        $region19: #{tpu_custom_call.1} parent=11 // pred_region
          %s223 = ssub.s32 4096, 4096
          %224 = vsyncadd [#allocation10], %s223
          %s225 = sshll.u32 [#allocation9], 4
          %s226 = int_to_ptr.vmem [resolvable:$true] %s225
          %231 = dma.hbm_to_vmem [thread:$0]  %s2, 4096, %s226, [#allocation10], 128, 128, 8
        $region20: #{tpu_custom_call.1} parent=11 // pred_fallthru
          _
        // Predicated region
        $region21: #{tpu_custom_call.1} parent=11 // pred_check
          %p232 = pneg %p86
        $region22: #{tpu_custom_call.1} parent=11 // pred_check_branch
          %234 = sbr.rel (%p232) target = $region24
        $region23: #{tpu_custom_call.1} parent=11 // pred_region
          _
        $region24: #{tpu_custom_call.1} parent=11 // pred_fallthru
          _
        // Predicated region
        $region25: #{tpu_custom_call.1} parent=11 // pred_check
          %p235 = pneg %p107
        $region26: #{tpu_custom_call.1} parent=11 // pred_check_branch
          %237 = sbr.rel (%p235) target = $region28
        $region27: #{tpu_custom_call.1} parent=11 // pred_region
          %s239 = ssub.s32 2048, 2048
          %240 = vsyncadd [#allocation10], %s239
          %s241 = sshll.u32 [#allocation11], 4
          %s242 = int_to_ptr.vmem [resolvable:$true] %s241
          %247 = dma.hbm_to_vmem [thread:$0]  %s4, 2048, %s242, [#allocation10], 128, 128, 8
        $region28: #{tpu_custom_call.1} parent=11 // pred_fallthru
          _
        // Predicated region
        $region29: #{tpu_custom_call.1} parent=11 // pred_check
          %p248 = pneg %p128
        $region30: #{tpu_custom_call.1} parent=11 // pred_check_branch
          %250 = sbr.rel (%p248) target = $region32
        $region31: #{tpu_custom_call.1} parent=11 // pred_region
          _
        $region32: #{tpu_custom_call.1} parent=11 // pred_fallthru
          _
        // Predicated region
        $region33: #{tpu_custom_call.1} parent=11 // pred_check
          %p251 = pneg %p149
        $region34: #{tpu_custom_call.1} parent=11 // pred_check_branch
          %253 = sbr.rel (%p251) target = $region36
        $region35: #{tpu_custom_call.1} parent=11 // pred_region
          _
        $region36: #{tpu_custom_call.1} parent=11 // pred_fallthru
          _
      $region12: #{tpu_custom_call.1} parent=5 // pred_fallthru
        _
      %p254 = scmp.lt.s32.totalorder %s23, 2
      // Predicated region
      $region37: #{tpu_custom_call.1} parent=5 // pred_check
        %p255 = pneg %p254
      $region38: #{tpu_custom_call.1} parent=5 // pred_check_branch
        %257 = sbr.rel (%p255) target = $region40
      $region39: #{tpu_custom_call.1} parent=5 // pred_region
        _
      $region40: #{tpu_custom_call.1} parent=5 // pred_fallthru
        _
      %p258 = scmp.le.s32.totalorder 1, %s23
      %p259 = scmp.lt.s32.totalorder %s23, 3
      %p260 = pnand %p258, %p259
      %p261 = pneg %p260
      // Predicated region
      $region41: #{tpu_custom_call.1} parent=5 // pred_check
        _
      $region42: #{tpu_custom_call.1} parent=5 // pred_check_branch
        %263 = sbr.rel (%p260) target = $region44
      $region43: #{tpu_custom_call.1} parent=5 // pred_region
        %s264 = ssub.s32 %s23, 1
        // Predicated region
        $region45: #{tpu_custom_call.1} parent=43 // pred_check
          %p265 = pneg %p44
        $region46: #{tpu_custom_call.1} parent=43 // pred_check_branch
          %267 = sbr.rel (%p265) target = $region48
        $region47: #{tpu_custom_call.1} parent=43 // pred_region
          %268 = dma.done [#allocation7], 1024
        $region48: #{tpu_custom_call.1} parent=43 // pred_fallthru
          _
        // Predicated region
        $region49: #{tpu_custom_call.1} parent=43 // pred_check
          %p269 = pneg %p65
        $region50: #{tpu_custom_call.1} parent=43 // pred_check_branch
          %271 = sbr.rel (%p269) target = $region52
        $region51: #{tpu_custom_call.1} parent=43 // pred_region
          %272 = dma.done [#allocation10], 4096
        $region52: #{tpu_custom_call.1} parent=43 // pred_fallthru
          _
        // Predicated region
        $region53: #{tpu_custom_call.1} parent=43 // pred_check
          %p273 = pneg %p107
        $region54: #{tpu_custom_call.1} parent=43 // pred_check_branch
          %275 = sbr.rel (%p273) target = $region56
        $region55: #{tpu_custom_call.1} parent=43 // pred_region
          %276 = dma.done [#allocation10], 2048
        $region56: #{tpu_custom_call.1} parent=43 // pred_fallthru
          _
        %p277 = pneg %p44
        %p278 = pneg %p41
        %p279 = pneg %p65
        %p280 = pneg %p62
        %p281 = pneg %p86
        %p282 = pneg %p83
        %p283 = pneg %p107
        %p284 = pneg %p104
        %p285 = pneg %p128
        %p286 = pneg %p125
        %p287 = pneg %p149
        %p288 = pneg %p146
        %p289 = pneg %p170
        %p290 = pneg %p167
        %p291 = pneg %p191
        %p292 = pneg %p188
        %p293 = scmp.eq.s32.totalorder %s28, 0
        // Predicated region
        $region57: #{tpu_custom_call.1} parent=43 // pred_check
          %p294 = pneg %p293
        $region58: #{tpu_custom_call.1} parent=43 // pred_check_branch
          %296 = sbr.rel (%p294) target = $region60
        $region59: #{tpu_custom_call.1} parent=43 // pred_region
          %v297 = vld [vmem:[%s6] sm:$0x1]
          %v298 = vld [vmem:[%s6 + $0x1] sm:$0x1]
          %299 = vst [vmem:[#allocation2] sm:$0x1] %v297
          %300 = vst [vmem:[#allocation2 + $0x1] sm:$0x1] %v298
          %301 = vst [vmem:[#allocation3] sm:$0xff] 0.0
          %302 = vst [vmem:[#allocation3 + $0x8] sm:$0xff] 0.0
        $region60: #{tpu_custom_call.1} parent=43 // pred_fallthru
          _
        %s303 = smul.u32 %s28, 8
        %s304 = sld [smem:[#allocation5 + %s303]]
        %s305 = scalar_lea.vmem [#allocation6], %s304
        %v306 = vld [vmem:[%s305] sm:$0x1]
        %v307 = vld [vmem:[#allocation2] sm:$0x1]
        %v308 = vadd.f32 %v306, %v307
        %v309 = vld [vmem:[#allocation9] sm:$0xff]
        %v310 = vld [vmem:[#allocation9 + $0x8] sm:$0xff]
        %v311 = vld [vmem:[#allocation9 + $0x10] sm:$0xff]
        %v312 = vld [vmem:[#allocation9 + $0x18] sm:$0xff]
        %v313 = vld [vmem:[#allocation9 + $0x20] sm:$0xff]
        %v314 = vld [vmem:[#allocation9 + $0x28] sm:$0xff]
        %v315 = vld [vmem:[#allocation9 + $0x30] sm:$0xff]
        %v316 = vld [vmem:[#allocation9 + $0x38] sm:$0xff]
        %v317 = vld [vmem:[#allocation9 + $0x40] sm:$0xff]
        %v318 = vld [vmem:[#allocation9 + $0x48] sm:$0xff]
        %v319 = vld [vmem:[#allocation9 + $0x50] sm:$0xff]
        %v320 = vld [vmem:[#allocation9 + $0x58] sm:$0xff]
        %v321 = vld [vmem:[#allocation9 + $0x60] sm:$0xff]
        %v322 = vld [vmem:[#allocation9 + $0x68] sm:$0xff]
        %v323 = vld [vmem:[#allocation9 + $0x70] sm:$0xff]
        %v324 = vld [vmem:[#allocation9 + $0x78] sm:$0xff]
        %v325 = vld [vmem:[%s3] sm:$0x1]
        %326 = vmatprep.subr.mxu0 0.0
        %327 = vmatpush1.msra.mxu0 %v309
        %328 = vmatprep.subr.mxu0 0.0
        %329 = vmatpush1.msra.mxu0 %v310
        %330 = vmatprep.subr.mxu0 0.0
        %331 = vmatpush1.msra.mxu0 %v311
        %332 = vmatprep.subr.mxu0 0.0
        %333 = vmatpush1.msra.mxu0 %v312
        %334 = vmatprep.subr.mxu0 0.0
        %335 = vmatpush1.msra.mxu0 %v313
        %336 = vmatprep.subr.mxu0 0.0
        %337 = vmatpush1.msra.mxu0 %v314
        %338 = vmatprep.subr.mxu0 0.0
        %339 = vmatpush1.msra.mxu0 %v315
        %340 = vmatprep.subr.mxu0 0.0
        %341 = vmatpush1.msra.mxu0 %v316
        %342 = vmatprep.subr.mxu0 0.0
        %343 = vmatpush1.msra.mxu0 %v317
        %344 = vmatprep.subr.mxu0 0.0
        %345 = vmatpush1.msra.mxu0 %v318
        %346 = vmatprep.subr.mxu0 0.0
        %347 = vmatpush1.msra.mxu0 %v319
        %348 = vmatprep.subr.mxu0 0.0
        %349 = vmatpush1.msra.mxu0 %v320
        %350 = vmatprep.subr.mxu0 0.0
        %351 = vmatpush1.msra.mxu0 %v321
        %352 = vmatprep.subr.mxu0 0.0
        %353 = vmatpush1.msra.mxu0 %v322
        %354 = vmatprep.subr.mxu0 0.0
        %355 = vmatpush1.msra.mxu0 %v323
        %356 = vmatprep.subr.mxu0 0.0
        %357 = vmatpush1.msra.mxu0 %v324
        %358 = vmatprep.subr.mxu0 0.0
        %359 = vmatpush1.msra.mxu0 0.0
        %360 = vmatprep.subr.mxu0 0.0
        %361 = vmatpush1.msra.mxu0 0.0
        %362 = vmatprep.subr.mxu0 0.0
        %363 = vmatpush1.msra.mxu0 0.0
        %364 = vmatprep.subr.mxu0 0.0
        %365 = vmatpush1.msra.mxu0 0.0
        %366 = vmatprep.subr.mxu0 0.0
        %367 = vmatpush1.msra.mxu0 0.0
        %368 = vmatprep.subr.mxu0 0.0
        %369 = vmatpush1.msra.mxu0 0.0
        %370 = vmatprep.subr.mxu0 0.0
        %371 = vmatpush1.msra.mxu0 0.0
        %372 = vmatprep.subr.mxu0 0.0
        %373 = vmatpush1.msra.mxu0 0.0
        %374 = vmatprep.subr.mxu0 0.0
        %375 = vmatpush1.msra.mxu0 0.0
        %376 = vmatprep.subr.mxu0 0.0
        %377 = vmatpush1.msra.mxu0 0.0
        %378 = vmatprep.subr.mxu0 0.0
        %379 = vmatpush1.msra.mxu0 0.0
        %380 = vmatprep.subr.mxu0 0.0
        %381 = vmatpush1.msra.mxu0 0.0
        %382 = vmatprep.subr.mxu0 0.0
        %383 = vmatpush1.msra.mxu0 0.0
        %384 = vmatprep.subr.mxu0 0.0
        %385 = vmatpush1.msra.mxu0 0.0
        %386 = vmatprep.subr.mxu0 0.0
        %387 = vmatpush1.msra.mxu0 0.0
        %388 = vmatprep.subr.mxu0 0.0
        %389 = vmatpush1.msra.mxu0 0.0
        %390 = vmatprep.mubr.f32.mxu0 0.0
        %391 = vmatmul.mubr.f32.gmra.mrb[0].mxu0 %v308
        %v392 = vpop.f32.mrb[0].mxu0
        %v393 = vadd.f32 %v325, %v392
        %v394 = vpop.f32.mrb[0].mxu0
        %395 = vdwg.mxu0
        %v396 = vtanh.pop %v393
        %397 = vst [vmem:[#allocation2] sm:$0x1] %v396
        %s398 = scalar_lea.vmem [#allocation2], 1
        %v399 = vld [vmem:[%s398] sm:$0x1]
        %v400 = vadd.f32 %v396, %v399
        %s401 = scalar_lea.vmem [#allocation9], 128
        %v402 = vld [vmem:[%s401] sm:$0xff]
        %v403 = vld [vmem:[%s401 + $0x8] sm:$0xff]
        %v404 = vld [vmem:[%s401 + $0x10] sm:$0xff]
        %v405 = vld [vmem:[%s401 + $0x18] sm:$0xff]
        %v406 = vld [vmem:[%s401 + $0x20] sm:$0xff]
        %v407 = vld [vmem:[%s401 + $0x28] sm:$0xff]
        %v408 = vld [vmem:[%s401 + $0x30] sm:$0xff]
        %v409 = vld [vmem:[%s401 + $0x38] sm:$0xff]
        %v410 = vld [vmem:[%s401 + $0x40] sm:$0xff]
        %v411 = vld [vmem:[%s401 + $0x48] sm:$0xff]
        %v412 = vld [vmem:[%s401 + $0x50] sm:$0xff]
        %v413 = vld [vmem:[%s401 + $0x58] sm:$0xff]
        %v414 = vld [vmem:[%s401 + $0x60] sm:$0xff]
        %v415 = vld [vmem:[%s401 + $0x68] sm:$0xff]
        %v416 = vld [vmem:[%s401 + $0x70] sm:$0xff]
        %v417 = vld [vmem:[%s401 + $0x78] sm:$0xff]
        %s418 = scalar_lea.vmem %s3, 1
        %v419 = vld [vmem:[%s418] sm:$0x1]
        %420 = vmatprep.subr.mxu0 0.0
        %421 = vmatpush1.msra.mxu0 %v402
        %422 = vmatprep.subr.mxu0 0.0
        %423 = vmatpush1.msra.mxu0 %v403
        %424 = vmatprep.subr.mxu0 0.0
        %425 = vmatpush1.msra.mxu0 %v404
        %426 = vmatprep.subr.mxu0 0.0
        %427 = vmatpush1.msra.mxu0 %v405
        %428 = vmatprep.subr.mxu0 0.0
        %429 = vmatpush1.msra.mxu0 %v406
        %430 = vmatprep.subr.mxu0 0.0
        %431 = vmatpush1.msra.mxu0 %v407
        %432 = vmatprep.subr.mxu0 0.0
        %433 = vmatpush1.msra.mxu0 %v408
        %434 = vmatprep.subr.mxu0 0.0
        %435 = vmatpush1.msra.mxu0 %v409
        %436 = vmatprep.subr.mxu0 0.0
        %437 = vmatpush1.msra.mxu0 %v410
        %438 = vmatprep.subr.mxu0 0.0
        %439 = vmatpush1.msra.mxu0 %v411
        %440 = vmatprep.subr.mxu0 0.0
        %441 = vmatpush1.msra.mxu0 %v412
        %442 = vmatprep.subr.mxu0 0.0
        %443 = vmatpush1.msra.mxu0 %v413
        %444 = vmatprep.subr.mxu0 0.0
        %445 = vmatpush1.msra.mxu0 %v414
        %446 = vmatprep.subr.mxu0 0.0
        %447 = vmatpush1.msra.mxu0 %v415
        %448 = vmatprep.subr.mxu0 0.0
        %449 = vmatpush1.msra.mxu0 %v416
        %450 = vmatprep.subr.mxu0 0.0
        %451 = vmatpush1.msra.mxu0 %v417
        %452 = vmatprep.subr.mxu0 0.0
        %453 = vmatpush1.msra.mxu0 0.0
        %454 = vmatprep.subr.mxu0 0.0
        %455 = vmatpush1.msra.mxu0 0.0
        %456 = vmatprep.subr.mxu0 0.0
        %457 = vmatpush1.msra.mxu0 0.0
        %458 = vmatprep.subr.mxu0 0.0
        %459 = vmatpush1.msra.mxu0 0.0
        %460 = vmatprep.subr.mxu0 0.0
        %461 = vmatpush1.msra.mxu0 0.0
        %462 = vmatprep.subr.mxu0 0.0
        %463 = vmatpush1.msra.mxu0 0.0
        %464 = vmatprep.subr.mxu0 0.0
        %465 = vmatpush1.msra.mxu0 0.0
        %466 = vmatprep.subr.mxu0 0.0
        %467 = vmatpush1.msra.mxu0 0.0
        %468 = vmatprep.subr.mxu0 0.0
        %469 = vmatpush1.msra.mxu0 0.0
        %470 = vmatprep.subr.mxu0 0.0
        %471 = vmatpush1.msra.mxu0 0.0
        %472 = vmatprep.subr.mxu0 0.0
        %473 = vmatpush1.msra.mxu0 0.0
        %474 = vmatprep.subr.mxu0 0.0
        %475 = vmatpush1.msra.mxu0 0.0
        %476 = vmatprep.subr.mxu0 0.0
        %477 = vmatpush1.msra.mxu0 0.0
        %478 = vmatprep.subr.mxu0 0.0
        %479 = vmatpush1.msra.mxu0 0.0
        %480 = vmatprep.subr.mxu0 0.0
        %481 = vmatpush1.msra.mxu0 0.0
        %482 = vmatprep.subr.mxu0 0.0
        %483 = vmatpush1.msra.mxu0 0.0
        %484 = vmatprep.mubr.f32.mxu0 0.0
        %485 = vmatmul.mubr.f32.gmra.mrb[0].mxu0 %v400
        %v486 = vpop.f32.mrb[0].mxu0
        %v487 = vadd.f32 %v419, %v486
        %v488 = vpop.f32.mrb[0].mxu0
        %489 = vdwg.mxu0
        %v490 = vtanh.pop %v487
        %491 = vst [vmem:[%s398] sm:$0x1] %v490
        %s492 = scalar_lea.vmem [#allocation3], %s303
        %493 = vst [vmem:[%s492] sm:$0x1] %v490
        %s494 = sadd.s32 %s303, 1
        %s495 = sld [smem:[#allocation5 + %s494]]
        %s496 = scalar_lea.vmem [#allocation6], %s495
        %v497 = vld [vmem:[%s496] sm:$0x1]
        %v498 = vld [vmem:[#allocation2] sm:$0x1]
        %v499 = vadd.f32 %v497, %v498
        %v500 = vld [vmem:[#allocation9] sm:$0xff]
        %v501 = vld [vmem:[#allocation9 + $0x8] sm:$0xff]
        %v502 = vld [vmem:[#allocation9 + $0x10] sm:$0xff]
        %v503 = vld [vmem:[#allocation9 + $0x18] sm:$0xff]
        %v504 = vld [vmem:[#allocation9 + $0x20] sm:$0xff]
        %v505 = vld [vmem:[#allocation9 + $0x28] sm:$0xff]
        %v506 = vld [vmem:[#allocation9 + $0x30] sm:$0xff]
        %v507 = vld [vmem:[#allocation9 + $0x38] sm:$0xff]
        %v508 = vld [vmem:[#allocation9 + $0x40] sm:$0xff]
        %v509 = vld [vmem:[#allocation9 + $0x48] sm:$0xff]
        %v510 = vld [vmem:[#allocation9 + $0x50] sm:$0xff]
        %v511 = vld [vmem:[#allocation9 + $0x58] sm:$0xff]
        %v512 = vld [vmem:[#allocation9 + $0x60] sm:$0xff]
        %v513 = vld [vmem:[#allocation9 + $0x68] sm:$0xff]
        %v514 = vld [vmem:[#allocation9 + $0x70] sm:$0xff]
        %v515 = vld [vmem:[#allocation9 + $0x78] sm:$0xff]
        %v516 = vld [vmem:[%s3] sm:$0x1]
        %517 = vmatprep.subr.mxu0 0.0
        %518 = vmatpush1.msra.mxu0 %v500
        %519 = vmatprep.subr.mxu0 0.0
        %520 = vmatpush1.msra.mxu0 %v501
        %521 = vmatprep.subr.mxu0 0.0
        %522 = vmatpush1.msra.mxu0 %v502
        %523 = vmatprep.subr.mxu0 0.0
        %524 = vmatpush1.msra.mxu0 %v503
        %525 = vmatprep.subr.mxu0 0.0
        %526 = vmatpush1.msra.mxu0 %v504
        %527 = vmatprep.subr.mxu0 0.0
        %528 = vmatpush1.msra.mxu0 %v505
        %529 = vmatprep.subr.mxu0 0.0
        %530 = vmatpush1.msra.mxu0 %v506
        %531 = vmatprep.subr.mxu0 0.0
        %532 = vmatpush1.msra.mxu0 %v507
        %533 = vmatprep.subr.mxu0 0.0
        %534 = vmatpush1.msra.mxu0 %v508
        %535 = vmatprep.subr.mxu0 0.0
        %536 = vmatpush1.msra.mxu0 %v509
        %537 = vmatprep.subr.mxu0 0.0
        %538 = vmatpush1.msra.mxu0 %v510
        %539 = vmatprep.subr.mxu0 0.0
        %540 = vmatpush1.msra.mxu0 %v511
        %541 = vmatprep.subr.mxu0 0.0
        %542 = vmatpush1.msra.mxu0 %v512
        %543 = vmatprep.subr.mxu0 0.0
        %544 = vmatpush1.msra.mxu0 %v513
        %545 = vmatprep.subr.mxu0 0.0
        %546 = vmatpush1.msra.mxu0 %v514
        %547 = vmatprep.subr.mxu0 0.0
        %548 = vmatpush1.msra.mxu0 %v515
        %549 = vmatprep.subr.mxu0 0.0
        %550 = vmatpush1.msra.mxu0 0.0
        %551 = vmatprep.subr.mxu0 0.0
        %552 = vmatpush1.msra.mxu0 0.0
        %553 = vmatprep.subr.mxu0 0.0
        %554 = vmatpush1.msra.mxu0 0.0
        %555 = vmatprep.subr.mxu0 0.0
        %556 = vmatpush1.msra.mxu0 0.0
        %557 = vmatprep.subr.mxu0 0.0
        %558 = vmatpush1.msra.mxu0 0.0
        %559 = vmatprep.subr.mxu0 0.0
        %560 = vmatpush1.msra.mxu0 0.0
        %561 = vmatprep.subr.mxu0 0.0
        %562 = vmatpush1.msra.mxu0 0.0
        %563 = vmatprep.subr.mxu0 0.0
        %564 = vmatpush1.msra.mxu0 0.0
        %565 = vmatprep.subr.mxu0 0.0
        %566 = vmatpush1.msra.mxu0 0.0
        %567 = vmatprep.subr.mxu0 0.0
        %568 = vmatpush1.msra.mxu0 0.0
        %569 = vmatprep.subr.mxu0 0.0
        %570 = vmatpush1.msra.mxu0 0.0
        %571 = vmatprep.subr.mxu0 0.0
        %572 = vmatpush1.msra.mxu0 0.0
        %573 = vmatprep.subr.mxu0 0.0
        %574 = vmatpush1.msra.mxu0 0.0
        %575 = vmatprep.subr.mxu0 0.0
        %576 = vmatpush1.msra.mxu0 0.0
        %577 = vmatprep.subr.mxu0 0.0
        %578 = vmatpush1.msra.mxu0 0.0
        %579 = vmatprep.subr.mxu0 0.0
        %580 = vmatpush1.msra.mxu0 0.0
        %581 = vmatprep.mubr.f32.mxu0 0.0
        %582 = vmatmul.mubr.f32.gmra.mrb[0].mxu0 %v499
        %v583 = vpop.f32.mrb[0].mxu0
        %v584 = vadd.f32 %v516, %v583
        %v585 = vpop.f32.mrb[0].mxu0
        %586 = vdwg.mxu0
        %v587 = vtanh.pop %v584
        %588 = vst [vmem:[#allocation2] sm:$0x1] %v587
        %v589 = vld [vmem:[%s398] sm:$0x1]
        %v590 = vadd.f32 %v587, %v589
        %v591 = vld [vmem:[%s401] sm:$0xff]
        %v592 = vld [vmem:[%s401 + $0x8] sm:$0xff]
        %v593 = vld [vmem:[%s401 + $0x10] sm:$0xff]
        %v594 = vld [vmem:[%s401 + $0x18] sm:$0xff]
        %v595 = vld [vmem:[%s401 + $0x20] sm:$0xff]
        %v596 = vld [vmem:[%s401 + $0x28] sm:$0xff]
        %v597 = vld [vmem:[%s401 + $0x30] sm:$0xff]
        %v598 = vld [vmem:[%s401 + $0x38] sm:$0xff]
        %v599 = vld [vmem:[%s401 + $0x40] sm:$0xff]
        %v600 = vld [vmem:[%s401 + $0x48] sm:$0xff]
        %v601 = vld [vmem:[%s401 + $0x50] sm:$0xff]
        %v602 = vld [vmem:[%s401 + $0x58] sm:$0xff]
        %v603 = vld [vmem:[%s401 + $0x60] sm:$0xff]
        %v604 = vld [vmem:[%s401 + $0x68] sm:$0xff]
        %v605 = vld [vmem:[%s401 + $0x70] sm:$0xff]
        %v606 = vld [vmem:[%s401 + $0x78] sm:$0xff]
        %v607 = vld [vmem:[%s418] sm:$0x1]
        %608 = vmatprep.subr.mxu0 0.0
        %609 = vmatpush1.msra.mxu0 %v591
        %610 = vmatprep.subr.mxu0 0.0
        %611 = vmatpush1.msra.mxu0 %v592
        %612 = vmatprep.subr.mxu0 0.0
        %613 = vmatpush1.msra.mxu0 %v593
        %614 = vmatprep.subr.mxu0 0.0
        %615 = vmatpush1.msra.mxu0 %v594
        %616 = vmatprep.subr.mxu0 0.0
        %617 = vmatpush1.msra.mxu0 %v595
        %618 = vmatprep.subr.mxu0 0.0
        %619 = vmatpush1.msra.mxu0 %v596
        %620 = vmatprep.subr.mxu0 0.0
        %621 = vmatpush1.msra.mxu0 %v597
        %622 = vmatprep.subr.mxu0 0.0
        %623 = vmatpush1.msra.mxu0 %v598
        %624 = vmatprep.subr.mxu0 0.0
        %625 = vmatpush1.msra.mxu0 %v599
        %626 = vmatprep.subr.mxu0 0.0
        %627 = vmatpush1.msra.mxu0 %v600
        %628 = vmatprep.subr.mxu0 0.0
        %629 = vmatpush1.msra.mxu0 %v601
        %630 = vmatprep.subr.mxu0 0.0
        %631 = vmatpush1.msra.mxu0 %v602
        %632 = vmatprep.subr.mxu0 0.0
        %633 = vmatpush1.msra.mxu0 %v603
        %634 = vmatprep.subr.mxu0 0.0
        %635 = vmatpush1.msra.mxu0 %v604
        %636 = vmatprep.subr.mxu0 0.0
        %637 = vmatpush1.msra.mxu0 %v605
        %638 = vmatprep.subr.mxu0 0.0
        %639 = vmatpush1.msra.mxu0 %v606
        %640 = vmatprep.subr.mxu0 0.0
        %641 = vmatpush1.msra.mxu0 0.0
        %642 = vmatprep.subr.mxu0 0.0
        %643 = vmatpush1.msra.mxu0 0.0
        %644 = vmatprep.subr.mxu0 0.0
        %645 = vmatpush1.msra.mxu0 0.0
        %646 = vmatprep.subr.mxu0 0.0
        %647 = vmatpush1.msra.mxu0 0.0
        %648 = vmatprep.subr.mxu0 0.0
        %649 = vmatpush1.msra.mxu0 0.0
        %650 = vmatprep.subr.mxu0 0.0
        %651 = vmatpush1.msra.mxu0 0.0
        %652 = vmatprep.subr.mxu0 0.0
        %653 = vmatpush1.msra.mxu0 0.0
        %654 = vmatprep.subr.mxu0 0.0
        %655 = vmatpush1.msra.mxu0 0.0
        %656 = vmatprep.subr.mxu0 0.0
        %657 = vmatpush1.msra.mxu0 0.0
        %658 = vmatprep.subr.mxu0 0.0
        %659 = vmatpush1.msra.mxu0 0.0
        %660 = vmatprep.subr.mxu0 0.0
        %661 = vmatpush1.msra.mxu0 0.0
        %662 = vmatprep.subr.mxu0 0.0
        %663 = vmatpush1.msra.mxu0 0.0
        %664 = vmatprep.subr.mxu0 0.0
        %665 = vmatpush1.msra.mxu0 0.0
        %666 = vmatprep.subr.mxu0 0.0
        %667 = vmatpush1.msra.mxu0 0.0
        %668 = vmatprep.subr.mxu0 0.0
        %669 = vmatpush1.msra.mxu0 0.0
        %670 = vmatprep.subr.mxu0 0.0
        %671 = vmatpush1.msra.mxu0 0.0
        %672 = vmatprep.mubr.f32.mxu0 0.0
        %673 = vmatmul.mubr.f32.gmra.mrb[0].mxu0 %v590
        %v674 = vpop.f32.mrb[0].mxu0
        %v675 = vadd.f32 %v607, %v674
        %v676 = vpop.f32.mrb[0].mxu0
        %677 = vdwg.mxu0
        %v678 = vtanh.pop %v675
        %679 = vst [vmem:[%s398] sm:$0x1] %v678
        %s680 = scalar_lea.vmem [#allocation3], %s494
        %681 = vst [vmem:[%s680] sm:$0x1] %v678
        %s682 = sadd.s32 %s303, 2
        %s683 = sld [smem:[#allocation5 + %s682]]
        %s684 = scalar_lea.vmem [#allocation6], %s683
        %v685 = vld [vmem:[%s684] sm:$0x1]
        %v686 = vld [vmem:[#allocation2] sm:$0x1]
        %v687 = vadd.f32 %v685, %v686
        %v688 = vld [vmem:[#allocation9] sm:$0xff]
        %v689 = vld [vmem:[#allocation9 + $0x8] sm:$0xff]
        %v690 = vld [vmem:[#allocation9 + $0x10] sm:$0xff]
        %v691 = vld [vmem:[#allocation9 + $0x18] sm:$0xff]
        %v692 = vld [vmem:[#allocation9 + $0x20] sm:$0xff]
        %v693 = vld [vmem:[#allocation9 + $0x28] sm:$0xff]
        %v694 = vld [vmem:[#allocation9 + $0x30] sm:$0xff]
        %v695 = vld [vmem:[#allocation9 + $0x38] sm:$0xff]
        %v696 = vld [vmem:[#allocation9 + $0x40] sm:$0xff]
        %v697 = vld [vmem:[#allocation9 + $0x48] sm:$0xff]
        %v698 = vld [vmem:[#allocation9 + $0x50] sm:$0xff]
        %v699 = vld [vmem:[#allocation9 + $0x58] sm:$0xff]
        %v700 = vld [vmem:[#allocation9 + $0x60] sm:$0xff]
        %v701 = vld [vmem:[#allocation9 + $0x68] sm:$0xff]
        %v702 = vld [vmem:[#allocation9 + $0x70] sm:$0xff]
        %v703 = vld [vmem:[#allocation9 + $0x78] sm:$0xff]
        %v704 = vld [vmem:[%s3] sm:$0x1]
        %705 = vmatprep.subr.mxu0 0.0
        %706 = vmatpush1.msra.mxu0 %v688
        %707 = vmatprep.subr.mxu0 0.0
        %708 = vmatpush1.msra.mxu0 %v689
        %709 = vmatprep.subr.mxu0 0.0
        %710 = vmatpush1.msra.mxu0 %v690
        %711 = vmatprep.subr.mxu0 0.0
        %712 = vmatpush1.msra.mxu0 %v691
        %713 = vmatprep.subr.mxu0 0.0
        %714 = vmatpush1.msra.mxu0 %v692
        %715 = vmatprep.subr.mxu0 0.0
        %716 = vmatpush1.msra.mxu0 %v693
        %717 = vmatprep.subr.mxu0 0.0
        %718 = vmatpush1.msra.mxu0 %v694
        %719 = vmatprep.subr.mxu0 0.0
        %720 = vmatpush1.msra.mxu0 %v695
        %721 = vmatprep.subr.mxu0 0.0
        %722 = vmatpush1.msra.mxu0 %v696
        %723 = vmatprep.subr.mxu0 0.0
        %724 = vmatpush1.msra.mxu0 %v697
        %725 = vmatprep.subr.mxu0 0.0
        %726 = vmatpush1.msra.mxu0 %v698
        %727 = vmatprep.subr.mxu0 0.0
        %728 = vmatpush1.msra.mxu0 %v699
        %729 = vmatprep.subr.mxu0 0.0
        %730 = vmatpush1.msra.mxu0 %v700
        %731 = vmatprep.subr.mxu0 0.0
        %732 = vmatpush1.msra.mxu0 %v701
        %733 = vmatprep.subr.mxu0 0.0
        %734 = vmatpush1.msra.mxu0 %v702
        %735 = vmatprep.subr.mxu0 0.0
        %736 = vmatpush1.msra.mxu0 %v703
        %737 = vmatprep.subr.mxu0 0.0
        %738 = vmatpush1.msra.mxu0 0.0
        %739 = vmatprep.subr.mxu0 0.0
        %740 = vmatpush1.msra.mxu0 0.0
        %741 = vmatprep.subr.mxu0 0.0
        %742 = vmatpush1.msra.mxu0 0.0
        %743 = vmatprep.subr.mxu0 0.0
        %744 = vmatpush1.msra.mxu0 0.0
        %745 = vmatprep.subr.mxu0 0.0
        %746 = vmatpush1.msra.mxu0 0.0
        %747 = vmatprep.subr.mxu0 0.0
        %748 = vmatpush1.msra.mxu0 0.0
        %749 = vmatprep.subr.mxu0 0.0
        %750 = vmatpush1.msra.mxu0 0.0
        %751 = vmatprep.subr.mxu0 0.0
        %752 = vmatpush1.msra.mxu0 0.0
        %753 = vmatprep.subr.mxu0 0.0
        %754 = vmatpush1.msra.mxu0 0.0
        %755 = vmatprep.subr.mxu0 0.0
        %756 = vmatpush1.msra.mxu0 0.0
        %757 = vmatprep.subr.mxu0 0.0
        %758 = vmatpush1.msra.mxu0 0.0
        %759 = vmatprep.subr.mxu0 0.0
        %760 = vmatpush1.msra.mxu0 0.0
        %761 = vmatprep.subr.mxu0 0.0
        %762 = vmatpush1.msra.mxu0 0.0
        %763 = vmatprep.subr.mxu0 0.0
        %764 = vmatpush1.msra.mxu0 0.0
        %765 = vmatprep.subr.mxu0 0.0
        %766 = vmatpush1.msra.mxu0 0.0
        %767 = vmatprep.subr.mxu0 0.0
        %768 = vmatpush1.msra.mxu0 0.0
        %769 = vmatprep.mubr.f32.mxu0 0.0
        %770 = vmatmul.mubr.f32.gmra.mrb[0].mxu0 %v687
        %v771 = vpop.f32.mrb[0].mxu0
        %v772 = vadd.f32 %v704, %v771
        %v773 = vpop.f32.mrb[0].mxu0
        %774 = vdwg.mxu0
        %v775 = vtanh.pop %v772
        %776 = vst [vmem:[#allocation2] sm:$0x1] %v775
        %v777 = vld [vmem:[%s398] sm:$0x1]
        %v778 = vadd.f32 %v775, %v777
        %v779 = vld [vmem:[%s401] sm:$0xff]
        %v780 = vld [vmem:[%s401 + $0x8] sm:$0xff]
        %v781 = vld [vmem:[%s401 + $0x10] sm:$0xff]
        %v782 = vld [vmem:[%s401 + $0x18] sm:$0xff]
        %v783 = vld [vmem:[%s401 + $0x20] sm:$0xff]
        %v784 = vld [vmem:[%s401 + $0x28] sm:$0xff]
        %v785 = vld [vmem:[%s401 + $0x30] sm:$0xff]
        %v786 = vld [vmem:[%s401 + $0x38] sm:$0xff]
        %v787 = vld [vmem:[%s401 + $0x40] sm:$0xff]
        %v788 = vld [vmem:[%s401 + $0x48] sm:$0xff]
        %v789 = vld [vmem:[%s401 + $0x50] sm:$0xff]
        %v790 = vld [vmem:[%s401 + $0x58] sm:$0xff]
        %v791 = vld [vmem:[%s401 + $0x60] sm:$0xff]
        %v792 = vld [vmem:[%s401 + $0x68] sm:$0xff]
        %v793 = vld [vmem:[%s401 + $0x70] sm:$0xff]
        %v794 = vld [vmem:[%s401 + $0x78] sm:$0xff]
        %v795 = vld [vmem:[%s418] sm:$0x1]
        %796 = vmatprep.subr.mxu0 0.0
        %797 = vmatpush1.msra.mxu0 %v779
        %798 = vmatprep.subr.mxu0 0.0
        %799 = vmatpush1.msra.mxu0 %v780
        %800 = vmatprep.subr.mxu0 0.0
        %801 = vmatpush1.msra.mxu0 %v781
        %802 = vmatprep.subr.mxu0 0.0
        %803 = vmatpush1.msra.mxu0 %v782
        %804 = vmatprep.subr.mxu0 0.0
        %805 = vmatpush1.msra.mxu0 %v783
        %806 = vmatprep.subr.mxu0 0.0
        %807 = vmatpush1.msra.mxu0 %v784
        %808 = vmatprep.subr.mxu0 0.0
        %809 = vmatpush1.msra.mxu0 %v785
        %810 = vmatprep.subr.mxu0 0.0
        %811 = vmatpush1.msra.mxu0 %v786
        %812 = vmatprep.subr.mxu0 0.0
        %813 = vmatpush1.msra.mxu0 %v787
        %814 = vmatprep.subr.mxu0 0.0
        %815 = vmatpush1.msra.mxu0 %v788
        %816 = vmatprep.subr.mxu0 0.0
        %817 = vmatpush1.msra.mxu0 %v789
        %818 = vmatprep.subr.mxu0 0.0
        %819 = vmatpush1.msra.mxu0 %v790
        %820 = vmatprep.subr.mxu0 0.0
        %821 = vmatpush1.msra.mxu0 %v791
        %822 = vmatprep.subr.mxu0 0.0
        %823 = vmatpush1.msra.mxu0 %v792
        %824 = vmatprep.subr.mxu0 0.0
        %825 = vmatpush1.msra.mxu0 %v793
        %826 = vmatprep.subr.mxu0 0.0
        %827 = vmatpush1.msra.mxu0 %v794
        %828 = vmatprep.subr.mxu0 0.0
        %829 = vmatpush1.msra.mxu0 0.0
        %830 = vmatprep.subr.mxu0 0.0
        %831 = vmatpush1.msra.mxu0 0.0
        %832 = vmatprep.subr.mxu0 0.0
        %833 = vmatpush1.msra.mxu0 0.0
        %834 = vmatprep.subr.mxu0 0.0
        %835 = vmatpush1.msra.mxu0 0.0
        %836 = vmatprep.subr.mxu0 0.0
        %837 = vmatpush1.msra.mxu0 0.0
        %838 = vmatprep.subr.mxu0 0.0
        %839 = vmatpush1.msra.mxu0 0.0
        %840 = vmatprep.subr.mxu0 0.0
        %841 = vmatpush1.msra.mxu0 0.0
        %842 = vmatprep.subr.mxu0 0.0
        %843 = vmatpush1.msra.mxu0 0.0
        %844 = vmatprep.subr.mxu0 0.0
        %845 = vmatpush1.msra.mxu0 0.0
        %846 = vmatprep.subr.mxu0 0.0
        %847 = vmatpush1.msra.mxu0 0.0
        %848 = vmatprep.subr.mxu0 0.0
        %849 = vmatpush1.msra.mxu0 0.0
        %850 = vmatprep.subr.mxu0 0.0
        %851 = vmatpush1.msra.mxu0 0.0
        %852 = vmatprep.subr.mxu0 0.0
        %853 = vmatpush1.msra.mxu0 0.0
        %854 = vmatprep.subr.mxu0 0.0
        %855 = vmatpush1.msra.mxu0 0.0
        %856 = vmatprep.subr.mxu0 0.0
        %857 = vmatpush1.msra.mxu0 0.0
        %858 = vmatprep.subr.mxu0 0.0
        %859 = vmatpush1.msra.mxu0 0.0
        %860 = vmatprep.mubr.f32.mxu0 0.0
        %861 = vmatmul.mubr.f32.gmra.mrb[0].mxu0 %v778
        %v862 = vpop.f32.mrb[0].mxu0
        %v863 = vadd.f32 %v795, %v862
        %v864 = vpop.f32.mrb[0].mxu0
        %865 = vdwg.mxu0
        %v866 = vtanh.pop %v863
        %867 = vst [vmem:[%s398] sm:$0x1] %v866
        %s868 = scalar_lea.vmem [#allocation3], %s682
        %869 = vst [vmem:[%s868] sm:$0x1] %v866
        %s870 = sadd.s32 %s303, 3
        %s871 = sld [smem:[#allocation5 + %s870]]
        %s872 = scalar_lea.vmem [#allocation6], %s871
        %v873 = vld [vmem:[%s872] sm:$0x1]
        %v874 = vld [vmem:[#allocation2] sm:$0x1]
        %v875 = vadd.f32 %v873, %v874
        %v876 = vld [vmem:[#allocation9] sm:$0xff]
        %v877 = vld [vmem:[#allocation9 + $0x8] sm:$0xff]
        %v878 = vld [vmem:[#allocation9 + $0x10] sm:$0xff]
        %v879 = vld [vmem:[#allocation9 + $0x18] sm:$0xff]
        %v880 = vld [vmem:[#allocation9 + $0x20] sm:$0xff]
        %v881 = vld [vmem:[#allocation9 + $0x28] sm:$0xff]
        %v882 = vld [vmem:[#allocation9 + $0x30] sm:$0xff]
        %v883 = vld [vmem:[#allocation9 + $0x38] sm:$0xff]
        %v884 = vld [vmem:[#allocation9 + $0x40] sm:$0xff]
        %v885 = vld [vmem:[#allocation9 + $0x48] sm:$0xff]
        %v886 = vld [vmem:[#allocation9 + $0x50] sm:$0xff]
        %v887 = vld [vmem:[#allocation9 + $0x58] sm:$0xff]
        %v888 = vld [vmem:[#allocation9 + $0x60] sm:$0xff]
        %v889 = vld [vmem:[#allocation9 + $0x68] sm:$0xff]
        %v890 = vld [vmem:[#allocation9 + $0x70] sm:$0xff]
        %v891 = vld [vmem:[#allocation9 + $0x78] sm:$0xff]
        %v892 = vld [vmem:[%s3] sm:$0x1]
        %893 = vmatprep.subr.mxu0 0.0
        %894 = vmatpush1.msra.mxu0 %v876
        %895 = vmatprep.subr.mxu0 0.0
        %896 = vmatpush1.msra.mxu0 %v877
        %897 = vmatprep.subr.mxu0 0.0
        %898 = vmatpush1.msra.mxu0 %v878
        %899 = vmatprep.subr.mxu0 0.0
        %900 = vmatpush1.msra.mxu0 %v879
        %901 = vmatprep.subr.mxu0 0.0
        %902 = vmatpush1.msra.mxu0 %v880
        %903 = vmatprep.subr.mxu0 0.0
        %904 = vmatpush1.msra.mxu0 %v881
        %905 = vmatprep.subr.mxu0 0.0
        %906 = vmatpush1.msra.mxu0 %v882
        %907 = vmatprep.subr.mxu0 0.0
        %908 = vmatpush1.msra.mxu0 %v883
        %909 = vmatprep.subr.mxu0 0.0
        %910 = vmatpush1.msra.mxu0 %v884
        %911 = vmatprep.subr.mxu0 0.0
        %912 = vmatpush1.msra.mxu0 %v885
        %913 = vmatprep.subr.mxu0 0.0
        %914 = vmatpush1.msra.mxu0 %v886
        %915 = vmatprep.subr.mxu0 0.0
        %916 = vmatpush1.msra.mxu0 %v887
        %917 = vmatprep.subr.mxu0 0.0
        %918 = vmatpush1.msra.mxu0 %v888
        %919 = vmatprep.subr.mxu0 0.0
        %920 = vmatpush1.msra.mxu0 %v889
        %921 = vmatprep.subr.mxu0 0.0
        %922 = vmatpush1.msra.mxu0 %v890
        %923 = vmatprep.subr.mxu0 0.0
        %924 = vmatpush1.msra.mxu0 %v891
        %925 = vmatprep.subr.mxu0 0.0
        %926 = vmatpush1.msra.mxu0 0.0
        %927 = vmatprep.subr.mxu0 0.0
        %928 = vmatpush1.msra.mxu0 0.0
        %929 = vmatprep.subr.mxu0 0.0
        %930 = vmatpush1.msra.mxu0 0.0
        %931 = vmatprep.subr.mxu0 0.0
        %932 = vmatpush1.msra.mxu0 0.0
        %933 = vmatprep.subr.mxu0 0.0
        %934 = vmatpush1.msra.mxu0 0.0
        %935 = vmatprep.subr.mxu0 0.0
        %936 = vmatpush1.msra.mxu0 0.0
        %937 = vmatprep.subr.mxu0 0.0
        %938 = vmatpush1.msra.mxu0 0.0
        %939 = vmatprep.subr.mxu0 0.0
        %940 = vmatpush1.msra.mxu0 0.0
        %941 = vmatprep.subr.mxu0 0.0
        %942 = vmatpush1.msra.mxu0 0.0
        %943 = vmatprep.subr.mxu0 0.0
        %944 = vmatpush1.msra.mxu0 0.0
        %945 = vmatprep.subr.mxu0 0.0
        %946 = vmatpush1.msra.mxu0 0.0
        %947 = vmatprep.subr.mxu0 0.0
        %948 = vmatpush1.msra.mxu0 0.0
        %949 = vmatprep.subr.mxu0 0.0
        %950 = vmatpush1.msra.mxu0 0.0
        %951 = vmatprep.subr.mxu0 0.0
        %952 = vmatpush1.msra.mxu0 0.0
        %953 = vmatprep.subr.mxu0 0.0
        %954 = vmatpush1.msra.mxu0 0.0
        %955 = vmatprep.subr.mxu0 0.0
        %956 = vmatpush1.msra.mxu0 0.0
        %957 = vmatprep.mubr.f32.mxu0 0.0
        %958 = vmatmul.mubr.f32.gmra.mrb[0].mxu0 %v875
        %v959 = vpop.f32.mrb[0].mxu0
        %v960 = vadd.f32 %v892, %v959
        %v961 = vpop.f32.mrb[0].mxu0
        %962 = vdwg.mxu0
        %v963 = vtanh.pop %v960
        %964 = vst [vmem:[#allocation2] sm:$0x1] %v963
        %v965 = vld [vmem:[%s398] sm:$0x1]
        %v966 = vadd.f32 %v963, %v965
        %v967 = vld [vmem:[%s401] sm:$0xff]
        %v968 = vld [vmem:[%s401 + $0x8] sm:$0xff]
        %v969 = vld [vmem:[%s401 + $0x10] sm:$0xff]
        %v970 = vld [vmem:[%s401 + $0x18] sm:$0xff]
        %v971 = vld [vmem:[%s401 + $0x20] sm:$0xff]
        %v972 = vld [vmem:[%s401 + $0x28] sm:$0xff]
        %v973 = vld [vmem:[%s401 + $0x30] sm:$0xff]
        %v974 = vld [vmem:[%s401 + $0x38] sm:$0xff]
        %v975 = vld [vmem:[%s401 + $0x40] sm:$0xff]
        %v976 = vld [vmem:[%s401 + $0x48] sm:$0xff]
        %v977 = vld [vmem:[%s401 + $0x50] sm:$0xff]
        %v978 = vld [vmem:[%s401 + $0x58] sm:$0xff]
        %v979 = vld [vmem:[%s401 + $0x60] sm:$0xff]
        %v980 = vld [vmem:[%s401 + $0x68] sm:$0xff]
        %v981 = vld [vmem:[%s401 + $0x70] sm:$0xff]
        %v982 = vld [vmem:[%s401 + $0x78] sm:$0xff]
        %v983 = vld [vmem:[%s418] sm:$0x1]
        %984 = vmatprep.subr.mxu0 0.0
        %985 = vmatpush1.msra.mxu0 %v967
        %986 = vmatprep.subr.mxu0 0.0
        %987 = vmatpush1.msra.mxu0 %v968
        %988 = vmatprep.subr.mxu0 0.0
        %989 = vmatpush1.msra.mxu0 %v969
        %990 = vmatprep.subr.mxu0 0.0
        %991 = vmatpush1.msra.mxu0 %v970
        %992 = vmatprep.subr.mxu0 0.0
        %993 = vmatpush1.msra.mxu0 %v971
        %994 = vmatprep.subr.mxu0 0.0
        %995 = vmatpush1.msra.mxu0 %v972
        %996 = vmatprep.subr.mxu0 0.0
        %997 = vmatpush1.msra.mxu0 %v973
        %998 = vmatprep.subr.mxu0 0.0
        %999 = vmatpush1.msra.mxu0 %v974
        %1000 = vmatprep.subr.mxu0 0.0
        %1001 = vmatpush1.msra.mxu0 %v975
        %1002 = vmatprep.subr.mxu0 0.0
        %1003 = vmatpush1.msra.mxu0 %v976
        %1004 = vmatprep.subr.mxu0 0.0
        %1005 = vmatpush1.msra.mxu0 %v977
        %1006 = vmatprep.subr.mxu0 0.0
        %1007 = vmatpush1.msra.mxu0 %v978
        %1008 = vmatprep.subr.mxu0 0.0
        %1009 = vmatpush1.msra.mxu0 %v979
        %1010 = vmatprep.subr.mxu0 0.0
        %1011 = vmatpush1.msra.mxu0 %v980
        %1012 = vmatprep.subr.mxu0 0.0
        %1013 = vmatpush1.msra.mxu0 %v981
        %1014 = vmatprep.subr.mxu0 0.0
        %1015 = vmatpush1.msra.mxu0 %v982
        %1016 = vmatprep.subr.mxu0 0.0
        %1017 = vmatpush1.msra.mxu0 0.0
        %1018 = vmatprep.subr.mxu0 0.0
        %1019 = vmatpush1.msra.mxu0 0.0
        %1020 = vmatprep.subr.mxu0 0.0
        %1021 = vmatpush1.msra.mxu0 0.0
        %1022 = vmatprep.subr.mxu0 0.0
        %1023 = vmatpush1.msra.mxu0 0.0
        %1024 = vmatprep.subr.mxu0 0.0
        %1025 = vmatpush1.msra.mxu0 0.0
        %1026 = vmatprep.subr.mxu0 0.0
        %1027 = vmatpush1.msra.mxu0 0.0
        %1028 = vmatprep.subr.mxu0 0.0
        %1029 = vmatpush1.msra.mxu0 0.0
        %1030 = vmatprep.subr.mxu0 0.0
        %1031 = vmatpush1.msra.mxu0 0.0
        %1032 = vmatprep.subr.mxu0 0.0
        %1033 = vmatpush1.msra.mxu0 0.0
        %1034 = vmatprep.subr.mxu0 0.0
        %1035 = vmatpush1.msra.mxu0 0.0
        %1036 = vmatprep.subr.mxu0 0.0
        %1037 = vmatpush1.msra.mxu0 0.0
        %1038 = vmatprep.subr.mxu0 0.0
        %1039 = vmatpush1.msra.mxu0 0.0
        %1040 = vmatprep.subr.mxu0 0.0
        %1041 = vmatpush1.msra.mxu0 0.0
        %1042 = vmatprep.subr.mxu0 0.0
        %1043 = vmatpush1.msra.mxu0 0.0
        %1044 = vmatprep.subr.mxu0 0.0
        %1045 = vmatpush1.msra.mxu0 0.0
        %1046 = vmatprep.subr.mxu0 0.0
        %1047 = vmatpush1.msra.mxu0 0.0
        %1048 = vmatprep.mubr.f32.mxu0 0.0
        %1049 = vmatmul.mubr.f32.gmra.mrb[0].mxu0 %v966
        %v1050 = vpop.f32.mrb[0].mxu0
        %v1051 = vadd.f32 %v983, %v1050
        %v1052 = vpop.f32.mrb[0].mxu0
        %1053 = vdwg.mxu0
        %v1054 = vtanh.pop %v1051
        %1055 = vst [vmem:[%s398] sm:$0x1] %v1054
        %s1056 = scalar_lea.vmem [#allocation3], %s870
        %1057 = vst [vmem:[%s1056] sm:$0x1] %v1054
        %s1058 = sadd.s32 %s303, 4
        %s1059 = sld [smem:[#allocation5 + %s1058]]
        %s1060 = scalar_lea.vmem [#allocation6], %s1059
        %v1061 = vld [vmem:[%s1060] sm:$0x1]
        %v1062 = vld [vmem:[#allocation2] sm:$0x1]
        %v1063 = vadd.f32 %v1061, %v1062
        %v1064 = vld [vmem:[#allocation9] sm:$0xff]
        %v1065 = vld [vmem:[#allocation9 + $0x8] sm:$0xff]
        %v1066 = vld [vmem:[#allocation9 + $0x10] sm:$0xff]
        %v1067 = vld [vmem:[#allocation9 + $0x18] sm:$0xff]
        %v1068 = vld [vmem:[#allocation9 + $0x20] sm:$0xff]
        %v1069 = vld [vmem:[#allocation9 + $0x28] sm:$0xff]
        %v1070 = vld [vmem:[#allocation9 + $0x30] sm:$0xff]
        %v1071 = vld [vmem:[#allocation9 + $0x38] sm:$0xff]
        %v1072 = vld [vmem:[#allocation9 + $0x40] sm:$0xff]
        %v1073 = vld [vmem:[#allocation9 + $0x48] sm:$0xff]
        %v1074 = vld [vmem:[#allocation9 + $0x50] sm:$0xff]
        %v1075 = vld [vmem:[#allocation9 + $0x58] sm:$0xff]
        %v1076 = vld [vmem:[#allocation9 + $0x60] sm:$0xff]
        %v1077 = vld [vmem:[#allocation9 + $0x68] sm:$0xff]
        %v1078 = vld [vmem:[#allocation9 + $0x70] sm:$0xff]
        %v1079 = vld [vmem:[#allocation9 + $0x78] sm:$0xff]
        %v1080 = vld [vmem:[%s3] sm:$0x1]
        %1081 = vmatprep.subr.mxu0 0.0
        %1082 = vmatpush1.msra.mxu0 %v1064
        %1083 = vmatprep.subr.mxu0 0.0
        %1084 = vmatpush1.msra.mxu0 %v1065
        %1085 = vmatprep.subr.mxu0 0.0
        %1086 = vmatpush1.msra.mxu0 %v1066
        %1087 = vmatprep.subr.mxu0 0.0
        %1088 = vmatpush1.msra.mxu0 %v1067
        %1089 = vmatprep.subr.mxu0 0.0
        %1090 = vmatpush1.msra.mxu0 %v1068
        %1091 = vmatprep.subr.mxu0 0.0
        %1092 = vmatpush1.msra.mxu0 %v1069
        %1093 = vmatprep.subr.mxu0 0.0
        %1094 = vmatpush1.msra.mxu0 %v1070
        %1095 = vmatprep.subr.mxu0 0.0
        %1096 = vmatpush1.msra.mxu0 %v1071
        %1097 = vmatprep.subr.mxu0 0.0
        %1098 = vmatpush1.msra.mxu0 %v1072
        %1099 = vmatprep.subr.mxu0 0.0
        %1100 = vmatpush1.msra.mxu0 %v1073
        %1101 = vmatprep.subr.mxu0 0.0
        %1102 = vmatpush1.msra.mxu0 %v1074
        %1103 = vmatprep.subr.mxu0 0.0
        %1104 = vmatpush1.msra.mxu0 %v1075
        %1105 = vmatprep.subr.mxu0 0.0
        %1106 = vmatpush1.msra.mxu0 %v1076
        %1107 = vmatprep.subr.mxu0 0.0
        %1108 = vmatpush1.msra.mxu0 %v1077
        %1109 = vmatprep.subr.mxu0 0.0
        %1110 = vmatpush1.msra.mxu0 %v1078
        %1111 = vmatprep.subr.mxu0 0.0
        %1112 = vmatpush1.msra.mxu0 %v1079
        %1113 = vmatprep.subr.mxu0 0.0
        %1114 = vmatpush1.msra.mxu0 0.0
        %1115 = vmatprep.subr.mxu0 0.0
        %1116 = vmatpush1.msra.mxu0 0.0
        %1117 = vmatprep.subr.mxu0 0.0
        %1118 = vmatpush1.msra.mxu0 0.0
        %1119 = vmatprep.subr.mxu0 0.0
        %1120 = vmatpush1.msra.mxu0 0.0
        %1121 = vmatprep.subr.mxu0 0.0
        %1122 = vmatpush1.msra.mxu0 0.0
        %1123 = vmatprep.subr.mxu0 0.0
        %1124 = vmatpush1.msra.mxu0 0.0
        %1125 = vmatprep.subr.mxu0 0.0
        %1126 = vmatpush1.msra.mxu0 0.0
        %1127 = vmatprep.subr.mxu0 0.0
        %1128 = vmatpush1.msra.mxu0 0.0
        %1129 = vmatprep.subr.mxu0 0.0
        %1130 = vmatpush1.msra.mxu0 0.0
        %1131 = vmatprep.subr.mxu0 0.0
        %1132 = vmatpush1.msra.mxu0 0.0
        %1133 = vmatprep.subr.mxu0 0.0
        %1134 = vmatpush1.msra.mxu0 0.0
        %1135 = vmatprep.subr.mxu0 0.0
        %1136 = vmatpush1.msra.mxu0 0.0
        %1137 = vmatprep.subr.mxu0 0.0
        %1138 = vmatpush1.msra.mxu0 0.0
        %1139 = vmatprep.subr.mxu0 0.0
        %1140 = vmatpush1.msra.mxu0 0.0
        %1141 = vmatprep.subr.mxu0 0.0
        %1142 = vmatpush1.msra.mxu0 0.0
        %1143 = vmatprep.subr.mxu0 0.0
        %1144 = vmatpush1.msra.mxu0 0.0
        %1145 = vmatprep.mubr.f32.mxu0 0.0
        %1146 = vmatmul.mubr.f32.gmra.mrb[0].mxu0 %v1063
        %v1147 = vpop.f32.mrb[0].mxu0
        %v1148 = vadd.f32 %v1080, %v1147
        %v1149 = vpop.f32.mrb[0].mxu0
        %1150 = vdwg.mxu0
        %v1151 = vtanh.pop %v1148
        %1152 = vst [vmem:[#allocation2] sm:$0x1] %v1151
        %v1153 = vld [vmem:[%s398] sm:$0x1]
        %v1154 = vadd.f32 %v1151, %v1153
        %v1155 = vld [vmem:[%s401] sm:$0xff]
        %v1156 = vld [vmem:[%s401 + $0x8] sm:$0xff]
        %v1157 = vld [vmem:[%s401 + $0x10] sm:$0xff]
        %v1158 = vld [vmem:[%s401 + $0x18] sm:$0xff]
        %v1159 = vld [vmem:[%s401 + $0x20] sm:$0xff]
        %v1160 = vld [vmem:[%s401 + $0x28] sm:$0xff]
        %v1161 = vld [vmem:[%s401 + $0x30] sm:$0xff]
        %v1162 = vld [vmem:[%s401 + $0x38] sm:$0xff]
        %v1163 = vld [vmem:[%s401 + $0x40] sm:$0xff]
        %v1164 = vld [vmem:[%s401 + $0x48] sm:$0xff]
        %v1165 = vld [vmem:[%s401 + $0x50] sm:$0xff]
        %v1166 = vld [vmem:[%s401 + $0x58] sm:$0xff]
        %v1167 = vld [vmem:[%s401 + $0x60] sm:$0xff]
        %v1168 = vld [vmem:[%s401 + $0x68] sm:$0xff]
        %v1169 = vld [vmem:[%s401 + $0x70] sm:$0xff]
        %v1170 = vld [vmem:[%s401 + $0x78] sm:$0xff]
        %v1171 = vld [vmem:[%s418] sm:$0x1]
        %1172 = vmatprep.subr.mxu0 0.0
        %1173 = vmatpush1.msra.mxu0 %v1155
        %1174 = vmatprep.subr.mxu0 0.0
        %1175 = vmatpush1.msra.mxu0 %v1156
        %1176 = vmatprep.subr.mxu0 0.0
        %1177 = vmatpush1.msra.mxu0 %v1157
        %1178 = vmatprep.subr.mxu0 0.0
        %1179 = vmatpush1.msra.mxu0 %v1158
        %1180 = vmatprep.subr.mxu0 0.0
        %1181 = vmatpush1.msra.mxu0 %v1159
        %1182 = vmatprep.subr.mxu0 0.0
        %1183 = vmatpush1.msra.mxu0 %v1160
        %1184 = vmatprep.subr.mxu0 0.0
        %1185 = vmatpush1.msra.mxu0 %v1161
        %1186 = vmatprep.subr.mxu0 0.0
        %1187 = vmatpush1.msra.mxu0 %v1162
        %1188 = vmatprep.subr.mxu0 0.0
        %1189 = vmatpush1.msra.mxu0 %v1163
        %1190 = vmatprep.subr.mxu0 0.0
        %1191 = vmatpush1.msra.mxu0 %v1164
        %1192 = vmatprep.subr.mxu0 0.0
        %1193 = vmatpush1.msra.mxu0 %v1165
        %1194 = vmatprep.subr.mxu0 0.0
        %1195 = vmatpush1.msra.mxu0 %v1166
        %1196 = vmatprep.subr.mxu0 0.0
        %1197 = vmatpush1.msra.mxu0 %v1167
        %1198 = vmatprep.subr.mxu0 0.0
        %1199 = vmatpush1.msra.mxu0 %v1168
        %1200 = vmatprep.subr.mxu0 0.0
        %1201 = vmatpush1.msra.mxu0 %v1169
        %1202 = vmatprep.subr.mxu0 0.0
        %1203 = vmatpush1.msra.mxu0 %v1170
        %1204 = vmatprep.subr.mxu0 0.0
        %1205 = vmatpush1.msra.mxu0 0.0
        %1206 = vmatprep.subr.mxu0 0.0
        %1207 = vmatpush1.msra.mxu0 0.0
        %1208 = vmatprep.subr.mxu0 0.0
        %1209 = vmatpush1.msra.mxu0 0.0
        %1210 = vmatprep.subr.mxu0 0.0
        %1211 = vmatpush1.msra.mxu0 0.0
        %1212 = vmatprep.subr.mxu0 0.0
        %1213 = vmatpush1.msra.mxu0 0.0
        %1214 = vmatprep.subr.mxu0 0.0
        %1215 = vmatpush1.msra.mxu0 0.0
        %1216 = vmatprep.subr.mxu0 0.0
        %1217 = vmatpush1.msra.mxu0 0.0
        %1218 = vmatprep.subr.mxu0 0.0
        %1219 = vmatpush1.msra.mxu0 0.0
        %1220 = vmatprep.subr.mxu0 0.0
        %1221 = vmatpush1.msra.mxu0 0.0
        %1222 = vmatprep.subr.mxu0 0.0
        %1223 = vmatpush1.msra.mxu0 0.0
        %1224 = vmatprep.subr.mxu0 0.0
        %1225 = vmatpush1.msra.mxu0 0.0
        %1226 = vmatprep.subr.mxu0 0.0
        %1227 = vmatpush1.msra.mxu0 0.0
        %1228 = vmatprep.subr.mxu0 0.0
        %1229 = vmatpush1.msra.mxu0 0.0
        %1230 = vmatprep.subr.mxu0 0.0
        %1231 = vmatpush1.msra.mxu0 0.0
        %1232 = vmatprep.subr.mxu0 0.0
        %1233 = vmatpush1.msra.mxu0 0.0
        %1234 = vmatprep.subr.mxu0 0.0
        %1235 = vmatpush1.msra.mxu0 0.0
        %1236 = vmatprep.mubr.f32.mxu0 0.0
        %1237 = vmatmul.mubr.f32.gmra.mrb[0].mxu0 %v1154
        %v1238 = vpop.f32.mrb[0].mxu0
        %v1239 = vadd.f32 %v1171, %v1238
        %v1240 = vpop.f32.mrb[0].mxu0
        %1241 = vdwg.mxu0
        %v1242 = vtanh.pop %v1239
        %1243 = vst [vmem:[%s398] sm:$0x1] %v1242
        %s1244 = scalar_lea.vmem [#allocation3], %s1058
        %1245 = vst [vmem:[%s1244] sm:$0x1] %v1242
        %s1246 = sadd.s32 %s303, 5
        %s1247 = sld [smem:[#allocation5 + %s1246]]
        %s1248 = scalar_lea.vmem [#allocation6], %s1247
        %v1249 = vld [vmem:[%s1248] sm:$0x1]
        %v1250 = vld [vmem:[#allocation2] sm:$0x1]
        %v1251 = vadd.f32 %v1249, %v1250
        %v1252 = vld [vmem:[#allocation9] sm:$0xff]
        %v1253 = vld [vmem:[#allocation9 + $0x8] sm:$0xff]
        %v1254 = vld [vmem:[#allocation9 + $0x10] sm:$0xff]
        %v1255 = vld [vmem:[#allocation9 + $0x18] sm:$0xff]
        %v1256 = vld [vmem:[#allocation9 + $0x20] sm:$0xff]
        %v1257 = vld [vmem:[#allocation9 + $0x28] sm:$0xff]
        %v1258 = vld [vmem:[#allocation9 + $0x30] sm:$0xff]
        %v1259 = vld [vmem:[#allocation9 + $0x38] sm:$0xff]
        %v1260 = vld [vmem:[#allocation9 + $0x40] sm:$0xff]
        %v1261 = vld [vmem:[#allocation9 + $0x48] sm:$0xff]
        %v1262 = vld [vmem:[#allocation9 + $0x50] sm:$0xff]
        %v1263 = vld [vmem:[#allocation9 + $0x58] sm:$0xff]
        %v1264 = vld [vmem:[#allocation9 + $0x60] sm:$0xff]
        %v1265 = vld [vmem:[#allocation9 + $0x68] sm:$0xff]
        %v1266 = vld [vmem:[#allocation9 + $0x70] sm:$0xff]
        %v1267 = vld [vmem:[#allocation9 + $0x78] sm:$0xff]
        %v1268 = vld [vmem:[%s3] sm:$0x1]
        %1269 = vmatprep.subr.mxu0 0.0
        %1270 = vmatpush1.msra.mxu0 %v1252
        %1271 = vmatprep.subr.mxu0 0.0
        %1272 = vmatpush1.msra.mxu0 %v1253
        %1273 = vmatprep.subr.mxu0 0.0
        %1274 = vmatpush1.msra.mxu0 %v1254
        %1275 = vmatprep.subr.mxu0 0.0
        %1276 = vmatpush1.msra.mxu0 %v1255
        %1277 = vmatprep.subr.mxu0 0.0
        %1278 = vmatpush1.msra.mxu0 %v1256
        %1279 = vmatprep.subr.mxu0 0.0
        %1280 = vmatpush1.msra.mxu0 %v1257
        %1281 = vmatprep.subr.mxu0 0.0
        %1282 = vmatpush1.msra.mxu0 %v1258
        %1283 = vmatprep.subr.mxu0 0.0
        %1284 = vmatpush1.msra.mxu0 %v1259
        %1285 = vmatprep.subr.mxu0 0.0
        %1286 = vmatpush1.msra.mxu0 %v1260
        %1287 = vmatprep.subr.mxu0 0.0
        %1288 = vmatpush1.msra.mxu0 %v1261
        %1289 = vmatprep.subr.mxu0 0.0
        %1290 = vmatpush1.msra.mxu0 %v1262
        %1291 = vmatprep.subr.mxu0 0.0
        %1292 = vmatpush1.msra.mxu0 %v1263
        %1293 = vmatprep.subr.mxu0 0.0
        %1294 = vmatpush1.msra.mxu0 %v1264
        %1295 = vmatprep.subr.mxu0 0.0
        %1296 = vmatpush1.msra.mxu0 %v1265
        %1297 = vmatprep.subr.mxu0 0.0
        %1298 = vmatpush1.msra.mxu0 %v1266
        %1299 = vmatprep.subr.mxu0 0.0
        %1300 = vmatpush1.msra.mxu0 %v1267
        %1301 = vmatprep.subr.mxu0 0.0
        %1302 = vmatpush1.msra.mxu0 0.0
        %1303 = vmatprep.subr.mxu0 0.0
        %1304 = vmatpush1.msra.mxu0 0.0
        %1305 = vmatprep.subr.mxu0 0.0
        %1306 = vmatpush1.msra.mxu0 0.0
        %1307 = vmatprep.subr.mxu0 0.0
        %1308 = vmatpush1.msra.mxu0 0.0
        %1309 = vmatprep.subr.mxu0 0.0
        %1310 = vmatpush1.msra.mxu0 0.0
        %1311 = vmatprep.subr.mxu0 0.0
        %1312 = vmatpush1.msra.mxu0 0.0
        %1313 = vmatprep.subr.mxu0 0.0
        %1314 = vmatpush1.msra.mxu0 0.0
        %1315 = vmatprep.subr.mxu0 0.0
        %1316 = vmatpush1.msra.mxu0 0.0
        %1317 = vmatprep.subr.mxu0 0.0
        %1318 = vmatpush1.msra.mxu0 0.0
        %1319 = vmatprep.subr.mxu0 0.0
        %1320 = vmatpush1.msra.mxu0 0.0
        %1321 = vmatprep.subr.mxu0 0.0
        %1322 = vmatpush1.msra.mxu0 0.0
        %1323 = vmatprep.subr.mxu0 0.0
        %1324 = vmatpush1.msra.mxu0 0.0
        %1325 = vmatprep.subr.mxu0 0.0
        %1326 = vmatpush1.msra.mxu0 0.0
        %1327 = vmatprep.subr.mxu0 0.0
        %1328 = vmatpush1.msra.mxu0 0.0
        %1329 = vmatprep.subr.mxu0 0.0
        %1330 = vmatpush1.msra.mxu0 0.0
        %1331 = vmatprep.subr.mxu0 0.0
        %1332 = vmatpush1.msra.mxu0 0.0
        %1333 = vmatprep.mubr.f32.mxu0 0.0
        %1334 = vmatmul.mubr.f32.gmra.mrb[0].mxu0 %v1251
        %v1335 = vpop.f32.mrb[0].mxu0
        %v1336 = vadd.f32 %v1268, %v1335
        %v1337 = vpop.f32.mrb[0].mxu0
        %1338 = vdwg.mxu0
        %v1339 = vtanh.pop %v1336
        %1340 = vst [vmem:[#allocation2] sm:$0x1] %v1339
        %v1341 = vld [vmem:[%s398] sm:$0x1]
        %v1342 = vadd.f32 %v1339, %v1341
        %v1343 = vld [vmem:[%s401] sm:$0xff]
        %v1344 = vld [vmem:[%s401 + $0x8] sm:$0xff]
        %v1345 = vld [vmem:[%s401 + $0x10] sm:$0xff]
        %v1346 = vld [vmem:[%s401 + $0x18] sm:$0xff]
        %v1347 = vld [vmem:[%s401 + $0x20] sm:$0xff]
        %v1348 = vld [vmem:[%s401 + $0x28] sm:$0xff]
        %v1349 = vld [vmem:[%s401 + $0x30] sm:$0xff]
        %v1350 = vld [vmem:[%s401 + $0x38] sm:$0xff]
        %v1351 = vld [vmem:[%s401 + $0x40] sm:$0xff]
        %v1352 = vld [vmem:[%s401 + $0x48] sm:$0xff]
        %v1353 = vld [vmem:[%s401 + $0x50] sm:$0xff]
        %v1354 = vld [vmem:[%s401 + $0x58] sm:$0xff]
        %v1355 = vld [vmem:[%s401 + $0x60] sm:$0xff]
        %v1356 = vld [vmem:[%s401 + $0x68] sm:$0xff]
        %v1357 = vld [vmem:[%s401 + $0x70] sm:$0xff]
        %v1358 = vld [vmem:[%s401 + $0x78] sm:$0xff]
        %v1359 = vld [vmem:[%s418] sm:$0x1]
        %1360 = vmatprep.subr.mxu0 0.0
        %1361 = vmatpush1.msra.mxu0 %v1343
        %1362 = vmatprep.subr.mxu0 0.0
        %1363 = vmatpush1.msra.mxu0 %v1344
        %1364 = vmatprep.subr.mxu0 0.0
        %1365 = vmatpush1.msra.mxu0 %v1345
        %1366 = vmatprep.subr.mxu0 0.0
        %1367 = vmatpush1.msra.mxu0 %v1346
        %1368 = vmatprep.subr.mxu0 0.0
        %1369 = vmatpush1.msra.mxu0 %v1347
        %1370 = vmatprep.subr.mxu0 0.0
        %1371 = vmatpush1.msra.mxu0 %v1348
        %1372 = vmatprep.subr.mxu0 0.0
        %1373 = vmatpush1.msra.mxu0 %v1349
        %1374 = vmatprep.subr.mxu0 0.0
        %1375 = vmatpush1.msra.mxu0 %v1350
        %1376 = vmatprep.subr.mxu0 0.0
        %1377 = vmatpush1.msra.mxu0 %v1351
        %1378 = vmatprep.subr.mxu0 0.0
        %1379 = vmatpush1.msra.mxu0 %v1352
        %1380 = vmatprep.subr.mxu0 0.0
        %1381 = vmatpush1.msra.mxu0 %v1353
        %1382 = vmatprep.subr.mxu0 0.0
        %1383 = vmatpush1.msra.mxu0 %v1354
        %1384 = vmatprep.subr.mxu0 0.0
        %1385 = vmatpush1.msra.mxu0 %v1355
        %1386 = vmatprep.subr.mxu0 0.0
        %1387 = vmatpush1.msra.mxu0 %v1356
        %1388 = vmatprep.subr.mxu0 0.0
        %1389 = vmatpush1.msra.mxu0 %v1357
        %1390 = vmatprep.subr.mxu0 0.0
        %1391 = vmatpush1.msra.mxu0 %v1358
        %1392 = vmatprep.subr.mxu0 0.0
        %1393 = vmatpush1.msra.mxu0 0.0
        %1394 = vmatprep.subr.mxu0 0.0
        %1395 = vmatpush1.msra.mxu0 0.0
        %1396 = vmatprep.subr.mxu0 0.0
        %1397 = vmatpush1.msra.mxu0 0.0
        %1398 = vmatprep.subr.mxu0 0.0
        %1399 = vmatpush1.msra.mxu0 0.0
        %1400 = vmatprep.subr.mxu0 0.0
        %1401 = vmatpush1.msra.mxu0 0.0
        %1402 = vmatprep.subr.mxu0 0.0
        %1403 = vmatpush1.msra.mxu0 0.0
        %1404 = vmatprep.subr.mxu0 0.0
        %1405 = vmatpush1.msra.mxu0 0.0
        %1406 = vmatprep.subr.mxu0 0.0
        %1407 = vmatpush1.msra.mxu0 0.0
        %1408 = vmatprep.subr.mxu0 0.0
        %1409 = vmatpush1.msra.mxu0 0.0
        %1410 = vmatprep.subr.mxu0 0.0
        %1411 = vmatpush1.msra.mxu0 0.0
        %1412 = vmatprep.subr.mxu0 0.0
        %1413 = vmatpush1.msra.mxu0 0.0
        %1414 = vmatprep.subr.mxu0 0.0
        %1415 = vmatpush1.msra.mxu0 0.0
        %1416 = vmatprep.subr.mxu0 0.0
        %1417 = vmatpush1.msra.mxu0 0.0
        %1418 = vmatprep.subr.mxu0 0.0
        %1419 = vmatpush1.msra.mxu0 0.0
        %1420 = vmatprep.subr.mxu0 0.0
        %1421 = vmatpush1.msra.mxu0 0.0
        %1422 = vmatprep.subr.mxu0 0.0
        %1423 = vmatpush1.msra.mxu0 0.0
        %1424 = vmatprep.mubr.f32.mxu0 0.0
        %1425 = vmatmul.mubr.f32.gmra.mrb[0].mxu0 %v1342
        %v1426 = vpop.f32.mrb[0].mxu0
        %v1427 = vadd.f32 %v1359, %v1426
        %v1428 = vpop.f32.mrb[0].mxu0
        %1429 = vdwg.mxu0
        %v1430 = vtanh.pop %v1427
        %1431 = vst [vmem:[%s398] sm:$0x1] %v1430
        %s1432 = scalar_lea.vmem [#allocation3], %s1246
        %1433 = vst [vmem:[%s1432] sm:$0x1] %v1430
        %s1434 = sadd.s32 %s303, 6
        %s1435 = sld [smem:[#allocation5 + %s1434]]
        %s1436 = scalar_lea.vmem [#allocation6], %s1435
        %v1437 = vld [vmem:[%s1436] sm:$0x1]
        %v1438 = vld [vmem:[#allocation2] sm:$0x1]
        %v1439 = vadd.f32 %v1437, %v1438
        %v1440 = vld [vmem:[#allocation9] sm:$0xff]
        %v1441 = vld [vmem:[#allocation9 + $0x8] sm:$0xff]
        %v1442 = vld [vmem:[#allocation9 + $0x10] sm:$0xff]
        %v1443 = vld [vmem:[#allocation9 + $0x18] sm:$0xff]
        %v1444 = vld [vmem:[#allocation9 + $0x20] sm:$0xff]
        %v1445 = vld [vmem:[#allocation9 + $0x28] sm:$0xff]
        %v1446 = vld [vmem:[#allocation9 + $0x30] sm:$0xff]
        %v1447 = vld [vmem:[#allocation9 + $0x38] sm:$0xff]
        %v1448 = vld [vmem:[#allocation9 + $0x40] sm:$0xff]
        %v1449 = vld [vmem:[#allocation9 + $0x48] sm:$0xff]
        %v1450 = vld [vmem:[#allocation9 + $0x50] sm:$0xff]
        %v1451 = vld [vmem:[#allocation9 + $0x58] sm:$0xff]
        %v1452 = vld [vmem:[#allocation9 + $0x60] sm:$0xff]
        %v1453 = vld [vmem:[#allocation9 + $0x68] sm:$0xff]
        %v1454 = vld [vmem:[#allocation9 + $0x70] sm:$0xff]
        %v1455 = vld [vmem:[#allocation9 + $0x78] sm:$0xff]
        %v1456 = vld [vmem:[%s3] sm:$0x1]
        %1457 = vmatprep.subr.mxu0 0.0
        %1458 = vmatpush1.msra.mxu0 %v1440
        %1459 = vmatprep.subr.mxu0 0.0
        %1460 = vmatpush1.msra.mxu0 %v1441
        %1461 = vmatprep.subr.mxu0 0.0
        %1462 = vmatpush1.msra.mxu0 %v1442
        %1463 = vmatprep.subr.mxu0 0.0
        %1464 = vmatpush1.msra.mxu0 %v1443
        %1465 = vmatprep.subr.mxu0 0.0
        %1466 = vmatpush1.msra.mxu0 %v1444
        %1467 = vmatprep.subr.mxu0 0.0
        %1468 = vmatpush1.msra.mxu0 %v1445
        %1469 = vmatprep.subr.mxu0 0.0
        %1470 = vmatpush1.msra.mxu0 %v1446
        %1471 = vmatprep.subr.mxu0 0.0
        %1472 = vmatpush1.msra.mxu0 %v1447
        %1473 = vmatprep.subr.mxu0 0.0
        %1474 = vmatpush1.msra.mxu0 %v1448
        %1475 = vmatprep.subr.mxu0 0.0
        %1476 = vmatpush1.msra.mxu0 %v1449
        %1477 = vmatprep.subr.mxu0 0.0
        %1478 = vmatpush1.msra.mxu0 %v1450
        %1479 = vmatprep.subr.mxu0 0.0
        %1480 = vmatpush1.msra.mxu0 %v1451
        %1481 = vmatprep.subr.mxu0 0.0
        %1482 = vmatpush1.msra.mxu0 %v1452
        %1483 = vmatprep.subr.mxu0 0.0
        %1484 = vmatpush1.msra.mxu0 %v1453
        %1485 = vmatprep.subr.mxu0 0.0
        %1486 = vmatpush1.msra.mxu0 %v1454
        %1487 = vmatprep.subr.mxu0 0.0
        %1488 = vmatpush1.msra.mxu0 %v1455
        %1489 = vmatprep.subr.mxu0 0.0
        %1490 = vmatpush1.msra.mxu0 0.0
        %1491 = vmatprep.subr.mxu0 0.0
        %1492 = vmatpush1.msra.mxu0 0.0
        %1493 = vmatprep.subr.mxu0 0.0
        %1494 = vmatpush1.msra.mxu0 0.0
        %1495 = vmatprep.subr.mxu0 0.0
        %1496 = vmatpush1.msra.mxu0 0.0
        %1497 = vmatprep.subr.mxu0 0.0
        %1498 = vmatpush1.msra.mxu0 0.0
        %1499 = vmatprep.subr.mxu0 0.0
        %1500 = vmatpush1.msra.mxu0 0.0
        %1501 = vmatprep.subr.mxu0 0.0
        %1502 = vmatpush1.msra.mxu0 0.0
        %1503 = vmatprep.subr.mxu0 0.0
        %1504 = vmatpush1.msra.mxu0 0.0
        %1505 = vmatprep.subr.mxu0 0.0
        %1506 = vmatpush1.msra.mxu0 0.0
        %1507 = vmatprep.subr.mxu0 0.0
        %1508 = vmatpush1.msra.mxu0 0.0
        %1509 = vmatprep.subr.mxu0 0.0
        %1510 = vmatpush1.msra.mxu0 0.0
        %1511 = vmatprep.subr.mxu0 0.0
        %1512 = vmatpush1.msra.mxu0 0.0
        %1513 = vmatprep.subr.mxu0 0.0
        %1514 = vmatpush1.msra.mxu0 0.0
        %1515 = vmatprep.subr.mxu0 0.0
        %1516 = vmatpush1.msra.mxu0 0.0
        %1517 = vmatprep.subr.mxu0 0.0
        %1518 = vmatpush1.msra.mxu0 0.0
        %1519 = vmatprep.subr.mxu0 0.0
        %1520 = vmatpush1.msra.mxu0 0.0
        %1521 = vmatprep.mubr.f32.mxu0 0.0
        %1522 = vmatmul.mubr.f32.gmra.mrb[0].mxu0 %v1439
        %v1523 = vpop.f32.mrb[0].mxu0
        %v1524 = vadd.f32 %v1456, %v1523
        %v1525 = vpop.f32.mrb[0].mxu0
        %1526 = vdwg.mxu0
        %v1527 = vtanh.pop %v1524
        %1528 = vst [vmem:[#allocation2] sm:$0x1] %v1527
        %v1529 = vld [vmem:[%s398] sm:$0x1]
        %v1530 = vadd.f32 %v1527, %v1529
        %v1531 = vld [vmem:[%s401] sm:$0xff]
        %v1532 = vld [vmem:[%s401 + $0x8] sm:$0xff]
        %v1533 = vld [vmem:[%s401 + $0x10] sm:$0xff]
        %v1534 = vld [vmem:[%s401 + $0x18] sm:$0xff]
        %v1535 = vld [vmem:[%s401 + $0x20] sm:$0xff]
        %v1536 = vld [vmem:[%s401 + $0x28] sm:$0xff]
        %v1537 = vld [vmem:[%s401 + $0x30] sm:$0xff]
        %v1538 = vld [vmem:[%s401 + $0x38] sm:$0xff]
        %v1539 = vld [vmem:[%s401 + $0x40] sm:$0xff]
        %v1540 = vld [vmem:[%s401 + $0x48] sm:$0xff]
        %v1541 = vld [vmem:[%s401 + $0x50] sm:$0xff]
        %v1542 = vld [vmem:[%s401 + $0x58] sm:$0xff]
        %v1543 = vld [vmem:[%s401 + $0x60] sm:$0xff]
        %v1544 = vld [vmem:[%s401 + $0x68] sm:$0xff]
        %v1545 = vld [vmem:[%s401 + $0x70] sm:$0xff]
        %v1546 = vld [vmem:[%s401 + $0x78] sm:$0xff]
        %v1547 = vld [vmem:[%s418] sm:$0x1]
        %1548 = vmatprep.subr.mxu0 0.0
        %1549 = vmatpush1.msra.mxu0 %v1531
        %1550 = vmatprep.subr.mxu0 0.0
        %1551 = vmatpush1.msra.mxu0 %v1532
        %1552 = vmatprep.subr.mxu0 0.0
        %1553 = vmatpush1.msra.mxu0 %v1533
        %1554 = vmatprep.subr.mxu0 0.0
        %1555 = vmatpush1.msra.mxu0 %v1534
        %1556 = vmatprep.subr.mxu0 0.0
        %1557 = vmatpush1.msra.mxu0 %v1535
        %1558 = vmatprep.subr.mxu0 0.0
        %1559 = vmatpush1.msra.mxu0 %v1536
        %1560 = vmatprep.subr.mxu0 0.0
        %1561 = vmatpush1.msra.mxu0 %v1537
        %1562 = vmatprep.subr.mxu0 0.0
        %1563 = vmatpush1.msra.mxu0 %v1538
        %1564 = vmatprep.subr.mxu0 0.0
        %1565 = vmatpush1.msra.mxu0 %v1539
        %1566 = vmatprep.subr.mxu0 0.0
        %1567 = vmatpush1.msra.mxu0 %v1540
        %1568 = vmatprep.subr.mxu0 0.0
        %1569 = vmatpush1.msra.mxu0 %v1541
        %1570 = vmatprep.subr.mxu0 0.0
        %1571 = vmatpush1.msra.mxu0 %v1542
        %1572 = vmatprep.subr.mxu0 0.0
        %1573 = vmatpush1.msra.mxu0 %v1543
        %1574 = vmatprep.subr.mxu0 0.0
        %1575 = vmatpush1.msra.mxu0 %v1544
        %1576 = vmatprep.subr.mxu0 0.0
        %1577 = vmatpush1.msra.mxu0 %v1545
        %1578 = vmatprep.subr.mxu0 0.0
        %1579 = vmatpush1.msra.mxu0 %v1546
        %1580 = vmatprep.subr.mxu0 0.0
        %1581 = vmatpush1.msra.mxu0 0.0
        %1582 = vmatprep.subr.mxu0 0.0
        %1583 = vmatpush1.msra.mxu0 0.0
        %1584 = vmatprep.subr.mxu0 0.0
        %1585 = vmatpush1.msra.mxu0 0.0
        %1586 = vmatprep.subr.mxu0 0.0
        %1587 = vmatpush1.msra.mxu0 0.0
        %1588 = vmatprep.subr.mxu0 0.0
        %1589 = vmatpush1.msra.mxu0 0.0
        %1590 = vmatprep.subr.mxu0 0.0
        %1591 = vmatpush1.msra.mxu0 0.0
        %1592 = vmatprep.subr.mxu0 0.0
        %1593 = vmatpush1.msra.mxu0 0.0
        %1594 = vmatprep.subr.mxu0 0.0
        %1595 = vmatpush1.msra.mxu0 0.0
        %1596 = vmatprep.subr.mxu0 0.0
        %1597 = vmatpush1.msra.mxu0 0.0
        %1598 = vmatprep.subr.mxu0 0.0
        %1599 = vmatpush1.msra.mxu0 0.0
        %1600 = vmatprep.subr.mxu0 0.0
        %1601 = vmatpush1.msra.mxu0 0.0
        %1602 = vmatprep.subr.mxu0 0.0
        %1603 = vmatpush1.msra.mxu0 0.0
        %1604 = vmatprep.subr.mxu0 0.0
        %1605 = vmatpush1.msra.mxu0 0.0
        %1606 = vmatprep.subr.mxu0 0.0
        %1607 = vmatpush1.msra.mxu0 0.0
        %1608 = vmatprep.subr.mxu0 0.0
        %1609 = vmatpush1.msra.mxu0 0.0
        %1610 = vmatprep.subr.mxu0 0.0
        %1611 = vmatpush1.msra.mxu0 0.0
        %1612 = vmatprep.mubr.f32.mxu0 0.0
        %1613 = vmatmul.mubr.f32.gmra.mrb[0].mxu0 %v1530
        %v1614 = vpop.f32.mrb[0].mxu0
        %v1615 = vadd.f32 %v1547, %v1614
        %v1616 = vpop.f32.mrb[0].mxu0
        %1617 = vdwg.mxu0
        %v1618 = vtanh.pop %v1615
        %1619 = vst [vmem:[%s398] sm:$0x1] %v1618
        %s1620 = scalar_lea.vmem [#allocation3], %s1434
        %1621 = vst [vmem:[%s1620] sm:$0x1] %v1618
        %s1622 = sadd.s32 %s303, 7
        %s1623 = sld [smem:[#allocation5 + %s1622]]
        %s1624 = scalar_lea.vmem [#allocation6], %s1623
        %v1625 = vld [vmem:[%s1624] sm:$0x1]
        %v1626 = vld [vmem:[#allocation2] sm:$0x1]
        %v1627 = vadd.f32 %v1625, %v1626
        %v1628 = vld [vmem:[#allocation9] sm:$0xff]
        %v1629 = vld [vmem:[#allocation9 + $0x8] sm:$0xff]
        %v1630 = vld [vmem:[#allocation9 + $0x10] sm:$0xff]
        %v1631 = vld [vmem:[#allocation9 + $0x18] sm:$0xff]
        %v1632 = vld [vmem:[#allocation9 + $0x20] sm:$0xff]
        %v1633 = vld [vmem:[#allocation9 + $0x28] sm:$0xff]
        %v1634 = vld [vmem:[#allocation9 + $0x30] sm:$0xff]
        %v1635 = vld [vmem:[#allocation9 + $0x38] sm:$0xff]
        %v1636 = vld [vmem:[#allocation9 + $0x40] sm:$0xff]
        %v1637 = vld [vmem:[#allocation9 + $0x48] sm:$0xff]
        %v1638 = vld [vmem:[#allocation9 + $0x50] sm:$0xff]
        %v1639 = vld [vmem:[#allocation9 + $0x58] sm:$0xff]
        %v1640 = vld [vmem:[#allocation9 + $0x60] sm:$0xff]
        %v1641 = vld [vmem:[#allocation9 + $0x68] sm:$0xff]
        %v1642 = vld [vmem:[#allocation9 + $0x70] sm:$0xff]
        %v1643 = vld [vmem:[#allocation9 + $0x78] sm:$0xff]
        %v1644 = vld [vmem:[%s3] sm:$0x1]
        %1645 = vmatprep.subr.mxu0 0.0
        %1646 = vmatpush1.msra.mxu0 %v1628
        %1647 = vmatprep.subr.mxu0 0.0
        %1648 = vmatpush1.msra.mxu0 %v1629
        %1649 = vmatprep.subr.mxu0 0.0
        %1650 = vmatpush1.msra.mxu0 %v1630
        %1651 = vmatprep.subr.mxu0 0.0
        %1652 = vmatpush1.msra.mxu0 %v1631
        %1653 = vmatprep.subr.mxu0 0.0
        %1654 = vmatpush1.msra.mxu0 %v1632
        %1655 = vmatprep.subr.mxu0 0.0
        %1656 = vmatpush1.msra.mxu0 %v1633
        %1657 = vmatprep.subr.mxu0 0.0
        %1658 = vmatpush1.msra.mxu0 %v1634
        %1659 = vmatprep.subr.mxu0 0.0
        %1660 = vmatpush1.msra.mxu0 %v1635
        %1661 = vmatprep.subr.mxu0 0.0
        %1662 = vmatpush1.msra.mxu0 %v1636
        %1663 = vmatprep.subr.mxu0 0.0
        %1664 = vmatpush1.msra.mxu0 %v1637
        %1665 = vmatprep.subr.mxu0 0.0
        %1666 = vmatpush1.msra.mxu0 %v1638
        %1667 = vmatprep.subr.mxu0 0.0
        %1668 = vmatpush1.msra.mxu0 %v1639
        %1669 = vmatprep.subr.mxu0 0.0
        %1670 = vmatpush1.msra.mxu0 %v1640
        %1671 = vmatprep.subr.mxu0 0.0
        %1672 = vmatpush1.msra.mxu0 %v1641
        %1673 = vmatprep.subr.mxu0 0.0
        %1674 = vmatpush1.msra.mxu0 %v1642
        %1675 = vmatprep.subr.mxu0 0.0
        %1676 = vmatpush1.msra.mxu0 %v1643
        %1677 = vmatprep.subr.mxu0 0.0
        %1678 = vmatpush1.msra.mxu0 0.0
        %1679 = vmatprep.subr.mxu0 0.0
        %1680 = vmatpush1.msra.mxu0 0.0
        %1681 = vmatprep.subr.mxu0 0.0
        %1682 = vmatpush1.msra.mxu0 0.0
        %1683 = vmatprep.subr.mxu0 0.0
        %1684 = vmatpush1.msra.mxu0 0.0
        %1685 = vmatprep.subr.mxu0 0.0
        %1686 = vmatpush1.msra.mxu0 0.0
        %1687 = vmatprep.subr.mxu0 0.0
        %1688 = vmatpush1.msra.mxu0 0.0
        %1689 = vmatprep.subr.mxu0 0.0
        %1690 = vmatpush1.msra.mxu0 0.0
        %1691 = vmatprep.subr.mxu0 0.0
        %1692 = vmatpush1.msra.mxu0 0.0
        %1693 = vmatprep.subr.mxu0 0.0
        %1694 = vmatpush1.msra.mxu0 0.0
        %1695 = vmatprep.subr.mxu0 0.0
        %1696 = vmatpush1.msra.mxu0 0.0
        %1697 = vmatprep.subr.mxu0 0.0
        %1698 = vmatpush1.msra.mxu0 0.0
        %1699 = vmatprep.subr.mxu0 0.0
        %1700 = vmatpush1.msra.mxu0 0.0
        %1701 = vmatprep.subr.mxu0 0.0
        %1702 = vmatpush1.msra.mxu0 0.0
        %1703 = vmatprep.subr.mxu0 0.0
        %1704 = vmatpush1.msra.mxu0 0.0
        %1705 = vmatprep.subr.mxu0 0.0
        %1706 = vmatpush1.msra.mxu0 0.0
        %1707 = vmatprep.subr.mxu0 0.0
        %1708 = vmatpush1.msra.mxu0 0.0
        %1709 = vmatprep.mubr.f32.mxu0 0.0
        %1710 = vmatmul.mubr.f32.gmra.mrb[0].mxu0 %v1627
        %v1711 = vpop.f32.mrb[0].mxu0
        %v1712 = vadd.f32 %v1644, %v1711
        %v1713 = vpop.f32.mrb[0].mxu0
        %1714 = vdwg.mxu0
        %v1715 = vtanh.pop %v1712
        %1716 = vst [vmem:[#allocation2] sm:$0x1] %v1715
        %v1717 = vld [vmem:[%s398] sm:$0x1]
        %v1718 = vadd.f32 %v1715, %v1717
        %v1719 = vld [vmem:[%s401] sm:$0xff]
        %v1720 = vld [vmem:[%s401 + $0x8] sm:$0xff]
        %v1721 = vld [vmem:[%s401 + $0x10] sm:$0xff]
        %v1722 = vld [vmem:[%s401 + $0x18] sm:$0xff]
        %v1723 = vld [vmem:[%s401 + $0x20] sm:$0xff]
        %v1724 = vld [vmem:[%s401 + $0x28] sm:$0xff]
        %v1725 = vld [vmem:[%s401 + $0x30] sm:$0xff]
        %v1726 = vld [vmem:[%s401 + $0x38] sm:$0xff]
        %v1727 = vld [vmem:[%s401 + $0x40] sm:$0xff]
        %v1728 = vld [vmem:[%s401 + $0x48] sm:$0xff]
        %v1729 = vld [vmem:[%s401 + $0x50] sm:$0xff]
        %v1730 = vld [vmem:[%s401 + $0x58] sm:$0xff]
        %v1731 = vld [vmem:[%s401 + $0x60] sm:$0xff]
        %v1732 = vld [vmem:[%s401 + $0x68] sm:$0xff]
        %v1733 = vld [vmem:[%s401 + $0x70] sm:$0xff]
        %v1734 = vld [vmem:[%s401 + $0x78] sm:$0xff]
        %v1735 = vld [vmem:[%s418] sm:$0x1]
        %1736 = vmatprep.subr.mxu0 0.0
        %1737 = vmatpush1.msra.mxu0 %v1719
        %1738 = vmatprep.subr.mxu0 0.0
        %1739 = vmatpush1.msra.mxu0 %v1720
        %1740 = vmatprep.subr.mxu0 0.0
        %1741 = vmatpush1.msra.mxu0 %v1721
        %1742 = vmatprep.subr.mxu0 0.0
        %1743 = vmatpush1.msra.mxu0 %v1722
        %1744 = vmatprep.subr.mxu0 0.0
        %1745 = vmatpush1.msra.mxu0 %v1723
        %1746 = vmatprep.subr.mxu0 0.0
        %1747 = vmatpush1.msra.mxu0 %v1724
        %1748 = vmatprep.subr.mxu0 0.0
        %1749 = vmatpush1.msra.mxu0 %v1725
        %1750 = vmatprep.subr.mxu0 0.0
        %1751 = vmatpush1.msra.mxu0 %v1726
        %1752 = vmatprep.subr.mxu0 0.0
        %1753 = vmatpush1.msra.mxu0 %v1727
        %1754 = vmatprep.subr.mxu0 0.0
        %1755 = vmatpush1.msra.mxu0 %v1728
        %1756 = vmatprep.subr.mxu0 0.0
        %1757 = vmatpush1.msra.mxu0 %v1729
        %1758 = vmatprep.subr.mxu0 0.0
        %1759 = vmatpush1.msra.mxu0 %v1730
        %1760 = vmatprep.subr.mxu0 0.0
        %1761 = vmatpush1.msra.mxu0 %v1731
        %1762 = vmatprep.subr.mxu0 0.0
        %1763 = vmatpush1.msra.mxu0 %v1732
        %1764 = vmatprep.subr.mxu0 0.0
        %1765 = vmatpush1.msra.mxu0 %v1733
        %1766 = vmatprep.subr.mxu0 0.0
        %1767 = vmatpush1.msra.mxu0 %v1734
        %1768 = vmatprep.subr.mxu0 0.0
        %1769 = vmatpush1.msra.mxu0 0.0
        %1770 = vmatprep.subr.mxu0 0.0
        %1771 = vmatpush1.msra.mxu0 0.0
        %1772 = vmatprep.subr.mxu0 0.0
        %1773 = vmatpush1.msra.mxu0 0.0
        %1774 = vmatprep.subr.mxu0 0.0
        %1775 = vmatpush1.msra.mxu0 0.0
        %1776 = vmatprep.subr.mxu0 0.0
        %1777 = vmatpush1.msra.mxu0 0.0
        %1778 = vmatprep.subr.mxu0 0.0
        %1779 = vmatpush1.msra.mxu0 0.0
        %1780 = vmatprep.subr.mxu0 0.0
        %1781 = vmatpush1.msra.mxu0 0.0
        %1782 = vmatprep.subr.mxu0 0.0
        %1783 = vmatpush1.msra.mxu0 0.0
        %1784 = vmatprep.subr.mxu0 0.0
        %1785 = vmatpush1.msra.mxu0 0.0
        %1786 = vmatprep.subr.mxu0 0.0
        %1787 = vmatpush1.msra.mxu0 0.0
        %1788 = vmatprep.subr.mxu0 0.0
        %1789 = vmatpush1.msra.mxu0 0.0
        %1790 = vmatprep.subr.mxu0 0.0
        %1791 = vmatpush1.msra.mxu0 0.0
        %1792 = vmatprep.subr.mxu0 0.0
        %1793 = vmatpush1.msra.mxu0 0.0
        %1794 = vmatprep.subr.mxu0 0.0
        %1795 = vmatpush1.msra.mxu0 0.0
        %1796 = vmatprep.subr.mxu0 0.0
        %1797 = vmatpush1.msra.mxu0 0.0
        %1798 = vmatprep.subr.mxu0 0.0
        %1799 = vmatpush1.msra.mxu0 0.0
        %1800 = vmatprep.mubr.f32.mxu0 0.0
        %1801 = vmatmul.mubr.f32.gmra.mrb[0].mxu0 %v1718
        %v1802 = vpop.f32.mrb[0].mxu0
        %v1803 = vadd.f32 %v1735, %v1802
        %v1804 = vpop.f32.mrb[0].mxu0
        %1805 = vdwg.mxu0
        %v1806 = vtanh.pop %v1803
        %1807 = vst [vmem:[%s398] sm:$0x1] %v1806
        %s1808 = scalar_lea.vmem [#allocation3], %s1622
        %1809 = vst [vmem:[%s1808] sm:$0x1] %v1806
        %p1810 = scmp.eq.s32.totalorder %s28, 1
        // Predicated region
        $region61: #{tpu_custom_call.1} parent=43 // pred_check
          %p1811 = pneg %p1810
        $region62: #{tpu_custom_call.1} parent=43 // pred_check_branch
          %1813 = sbr.rel (%p1811) target = $region64
        $region63: #{tpu_custom_call.1} parent=43 // pred_region
          %v1814 = vld [vmem:[#allocation3] sm:$0xff]
          %v1815 = vld [vmem:[#allocation3 + $0x8] sm:$0xff]
          %v1816 = vld [vmem:[#allocation11] sm:$0xff]
          %v1817 = vld [vmem:[#allocation11 + $0x8] sm:$0xff]
          %v1818 = vld [vmem:[#allocation11 + $0x10] sm:$0xff]
          %v1819 = vld [vmem:[#allocation11 + $0x18] sm:$0xff]
          %v1820 = vld [vmem:[#allocation11 + $0x20] sm:$0xff]
          %v1821 = vld [vmem:[#allocation11 + $0x28] sm:$0xff]
          %v1822 = vld [vmem:[#allocation11 + $0x30] sm:$0xff]
          %v1823 = vld [vmem:[#allocation11 + $0x38] sm:$0xff]
          %v1824 = vld [vmem:[#allocation11 + $0x40] sm:$0xff]
          %v1825 = vld [vmem:[#allocation11 + $0x48] sm:$0xff]
          %v1826 = vld [vmem:[#allocation11 + $0x50] sm:$0xff]
          %v1827 = vld [vmem:[#allocation11 + $0x58] sm:$0xff]
          %v1828 = vld [vmem:[#allocation11 + $0x60] sm:$0xff]
          %v1829 = vld [vmem:[#allocation11 + $0x68] sm:$0xff]
          %v1830 = vld [vmem:[#allocation11 + $0x70] sm:$0xff]
          %v1831 = vld [vmem:[#allocation11 + $0x78] sm:$0xff]
          %v1832 = vld [vmem:[%s5] sm:$0x1]
          %v1834 = vlaneseq
          %v1835 = vshrl.u32 %v1834, 7
          %v1836 = vsub.s32 0, %v1835
          %v1837 = vrot.slane %v1832, %v1836
          %1839 = vmatprep.subr.mxu0 0.0
          %1840 = vmatpush1.msra.mxu0 %v1816
          %1841 = vmatprep.subr.mxu0 0.0
          %1842 = vmatpush1.msra.mxu0 %v1817
          %1843 = vmatprep.subr.mxu0 0.0
          %1844 = vmatpush1.msra.mxu0 %v1818
          %1845 = vmatprep.subr.mxu0 0.0
          %1846 = vmatpush1.msra.mxu0 %v1819
          %1847 = vmatprep.subr.mxu0 0.0
          %1848 = vmatpush1.msra.mxu0 %v1820
          %1849 = vmatprep.subr.mxu0 0.0
          %1850 = vmatpush1.msra.mxu0 %v1821
          %1851 = vmatprep.subr.mxu0 0.0
          %1852 = vmatpush1.msra.mxu0 %v1822
          %1853 = vmatprep.subr.mxu0 0.0
          %1854 = vmatpush1.msra.mxu0 %v1823
          %1855 = vmatprep.subr.mxu0 0.0
          %1856 = vmatpush1.msra.mxu0 %v1824
          %1857 = vmatprep.subr.mxu0 0.0
          %1858 = vmatpush1.msra.mxu0 %v1825
          %1859 = vmatprep.subr.mxu0 0.0
          %1860 = vmatpush1.msra.mxu0 %v1826
          %1861 = vmatprep.subr.mxu0 0.0
          %1862 = vmatpush1.msra.mxu0 %v1827
          %1863 = vmatprep.subr.mxu0 0.0
          %1864 = vmatpush1.msra.mxu0 %v1828
          %1865 = vmatprep.subr.mxu0 0.0
          %1866 = vmatpush1.msra.mxu0 %v1829
          %1867 = vmatprep.subr.mxu0 0.0
          %1868 = vmatpush1.msra.mxu0 %v1830
          %1869 = vmatprep.subr.mxu0 0.0
          %1870 = vmatpush1.msra.mxu0 %v1831
          %1871 = vmatprep.subr.mxu0 0.0
          %1872 = vmatpush1.msra.mxu0 0.0
          %1873 = vmatprep.subr.mxu0 0.0
          %1874 = vmatpush1.msra.mxu0 0.0
          %1875 = vmatprep.subr.mxu0 0.0
          %1876 = vmatpush1.msra.mxu0 0.0
          %1877 = vmatprep.subr.mxu0 0.0
          %1878 = vmatpush1.msra.mxu0 0.0
          %1879 = vmatprep.subr.mxu0 0.0
          %1880 = vmatpush1.msra.mxu0 0.0
          %1881 = vmatprep.subr.mxu0 0.0
          %1882 = vmatpush1.msra.mxu0 0.0
          %1883 = vmatprep.subr.mxu0 0.0
          %1884 = vmatpush1.msra.mxu0 0.0
          %1885 = vmatprep.subr.mxu0 0.0
          %1886 = vmatpush1.msra.mxu0 0.0
          %1887 = vmatprep.subr.mxu0 0.0
          %1888 = vmatpush1.msra.mxu0 0.0
          %1889 = vmatprep.subr.mxu0 0.0
          %1890 = vmatpush1.msra.mxu0 0.0
          %1891 = vmatprep.subr.mxu0 0.0
          %1892 = vmatpush1.msra.mxu0 0.0
          %1893 = vmatprep.subr.mxu0 0.0
          %1894 = vmatpush1.msra.mxu0 0.0
          %1895 = vmatprep.subr.mxu0 0.0
          %1896 = vmatpush1.msra.mxu0 0.0
          %1897 = vmatprep.subr.mxu0 0.0
          %1898 = vmatpush1.msra.mxu0 0.0
          %1899 = vmatprep.subr.mxu0 0.0
          %1900 = vmatpush1.msra.mxu0 0.0
          %1901 = vmatprep.subr.mxu0 0.0
          %1902 = vmatpush1.msra.mxu0 0.0
          %1903 = vmatprep.mubr.f32.mxu0 0.0
          %1904 = vmatmul.mubr.f32.gmra.mrb[0].mxu0 %v1814
          %v1905 = vpop.f32.mrb[0].mxu0
          %v1906 = vadd.f32 %v1837, %v1905
          %v1907 = vpop.f32.mrb[0].mxu0
          %1908 = vmatprep.mubr.f32.mxu0 0.0
          %1909 = vmatmul.mubr.f32.gmra.mrb[0].mxu0 %v1815
          %v1910 = vpop.f32.mrb[0].mxu0
          %v1911 = vadd.f32 %v1837, %v1910
          %v1912 = vpop.f32.mrb[0].mxu0
          %1913 = vdwg.mxu0
          %1914 = vst [vmem:[#allocation12] sm:$0xff] %v1906
          %1915 = vst [vmem:[#allocation12 + $0x8] sm:$0xff] %v1911
          %v1916 = vld [vmem:[#allocation2] sm:$0x1]
          %v1917 = vld [vmem:[#allocation2 + $0x1] sm:$0x1]
          %1918 = vst [vmem:[#allocation13] sm:$0x1] %v1916
          %1919 = vst [vmem:[#allocation13 + $0x1] sm:$0x1] %v1917
        $region64: #{tpu_custom_call.1} parent=43 // pred_fallthru
          _
        // Predicated region
        $region65: #{tpu_custom_call.1} parent=43 // pred_check
          %p1920 = pneg %p167
        $region66: #{tpu_custom_call.1} parent=43 // pred_check_branch
          %1922 = sbr.rel (%p1920) target = $region68
        $region67: #{tpu_custom_call.1} parent=43 // pred_region
          %s1924 = ssub.s32 256, 256
          %1925 = vsyncadd [#allocation8], %s1924
          %s1926 = sshll.u32 [#allocation12], 4
          %s1927 = int_to_ptr.vmem [resolvable:$true] %s1926
          %1932 = dma.vmem_to_hbm [thread:$0]  %s1927, 256, %s7, [#allocation8], 128, 128, 8
        $region68: #{tpu_custom_call.1} parent=43 // pred_fallthru
          _
        // Predicated region
        $region69: #{tpu_custom_call.1} parent=43 // pred_check
          %p1933 = pneg %p188
        $region70: #{tpu_custom_call.1} parent=43 // pred_check_branch
          %1935 = sbr.rel (%p1933) target = $region72
        $region71: #{tpu_custom_call.1} parent=43 // pred_region
          %s1937 = ssub.s32 32, 32
          %1938 = vsyncadd [#allocation14], %s1937
          %s1939 = sshll.u32 [#allocation13], 4
          %s1940 = int_to_ptr.vmem [resolvable:$true] %s1939
          %1945 = dma.vmem_to_hbm [thread:$0]  %s1940, 32, %s8, [#allocation14], 16, 16, 1
        $region72: #{tpu_custom_call.1} parent=43 // pred_fallthru
          _
        // Predicated region
        $region73: #{tpu_custom_call.1} parent=43 // pred_check
          %p1946 = pneg %p167
        $region74: #{tpu_custom_call.1} parent=43 // pred_check_branch
          %1948 = sbr.rel (%p1946) target = $region76
        $region75: #{tpu_custom_call.1} parent=43 // pred_region
          %1949 = dma.done [#allocation8], 256
        $region76: #{tpu_custom_call.1} parent=43 // pred_fallthru
          _
        // Predicated region
        $region77: #{tpu_custom_call.1} parent=43 // pred_check
          %p1950 = pneg %p188
        $region78: #{tpu_custom_call.1} parent=43 // pred_check_branch
          %1952 = sbr.rel (%p1950) target = $region80
        $region79: #{tpu_custom_call.1} parent=43 // pred_region
          %1953 = dma.done [#allocation14], 32
        $region80: #{tpu_custom_call.1} parent=43 // pred_fallthru
          _
      $region44: #{tpu_custom_call.1} parent=5 // pred_fallthru
        _
      %p1954 = scmp.le.s32.totalorder 2, %s23
      // Predicated region
      $region81: #{tpu_custom_call.1} parent=5 // pred_check
        %p1955 = pneg %p1954
      $region82: #{tpu_custom_call.1} parent=5 // pred_check_branch
        %1957 = sbr.rel (%p1955) target = $region84
      $region83: #{tpu_custom_call.1} parent=5 // pred_region
        %s1958 = ssub.s32 %s23, 2
      $region84: #{tpu_custom_call.1} parent=5 // pred_fallthru
        _
    $region6: #{tpu_custom_call.1} parent=1 // loop_footer
      %s27 = sadd.s32 1, %s23
    $region7: #{tpu_custom_call.1} parent=1 // loop_footer_branch
      %22 = sbr.rel target = $region3
    $region8: #{tpu_custom_call.1} parent=1 // loop_exit
      _
    %1959 = vsyncpa [#allocation7], 1
    %s1960 = scalar_lea.sflag [#allocation7], 1
    %1961 = vsyncpa %s1960, 1
    %1962 = vsyncpa [#allocation10], 1
    %1963 = vsyncpa [#allocation8], 1
    %s1964 = scalar_lea.sflag [#allocation8], 1
    %1965 = vsyncpa %s1964, 1
    %1966 = vsyncpa [#allocation14], 1

</llo_original>
